<compile_context>
chip_gen: v7x
topology: tpu7x:2x2x1
jax: 0.10.0
libtpu: 0.0.40
codegen_flags: <defaults>
</compile_context>

<pallas_src>
import jax
import jax.numpy as jnp
from jax.experimental import pallas as pl
from jax.experimental.pallas import tpu as pltpu


STATE_DIM = 3              # Pendulum-v1 observation_space.shape[0]
ACTION_DIM = 1             # Pendulum-v1 action_space.shape[0]
IN_DIM = STATE_DIM + ACTION_DIM
HIDDEN = 256
DEFAULT_TILE_B = 2048      # batch-tile cap; must be a multiple of 128


def _round_up(x, m):
    return ((x + m - 1) // m) * m


def _cdiv(a, b):
    return -(-a // b)


def _chip_kind():
    """Coarse chip family from device_kind; defaults to the conservative path."""
    try:
        kind = jax.devices()[0].device_kind.lower()
    except Exception:
        kind = ""
    if "v7" in kind:
        return "v7"
    if "v6" in kind:
        return "v6"
    if "v5" in kind:
        return "v5"
    return "other"


def _make_critic_kernel(elem_dtype, mxu_head):
    """Build the kernel body for a given elementwise dtype / head strategy."""

    def kernel(x_ref, w1_ref, b1_ref, w2_ref, b2_ref, w3_ref, b3_ref, o_ref):
        # x_ref : (IN_DIM, TILE_B) f32   [state rows then action rows], batch on lanes
        # w1_ref: (HIDDEN, IN_DIM) elem  fc1.weight
        # b1_ref: (HIDDEN, 1)      elem
        # w2_ref: (HIDDEN, HIDDEN) bf16  fc2.weight (PyTorch orientation) - cast in wrapper
        # b2_ref: (HIDDEN, 1)      f32
        # w3_ref: (HIDDEN, 1) f32            [VPU head]   = fc3.weight.T
        #         (8, HIDDEN) bf16, row 0    [MXU head]   = fc3.weight zero-padded
        # b3_ref: (1, 1) f32
        # o_ref : (1, TILE_B) f32  Q-values, batch on lanes (lane-dense)
        x = x_ref[...]
        w1 = w1_ref[...]

        # ---- Layer 1: K = 4 is tiny, so do it on the VPU as broadcast FMAs.
        # (bf16 on v6e/v7x halves the VALU passes; f32 on v5e.)
        h1 = b1_ref[...]                                   # (H, 1), broadcasts
        for k in range(IN_DIM):
            xk = x[k:k + 1, :].astype(elem_dtype)          # (1, TB), tiny cast
            h1 = h1 + w1[:, k:k + 1] * xk                  # -> (H, TB)
        h1 = jnp.maximum(h1, 0.0)                          # (H, TILE_B) elem

        # ---- Layer 2: the only real MXU work; bf16 inputs, f32 accumulation.
        # w2 arrives pre-cast to bf16 (no per-step cast in the kernel).
        h1b = h1 if h1.dtype == jnp.bfloat16 else h1.astype(jnp.bfloat16)
        h2 = jnp.dot(w2_ref[...], h1b,
                     preferred_element_type=jnp.float32)   # (H, TILE_B) f32
        h2 = jnp.maximum(h2 + b2_ref[...], 0.0)

        # ---- Head (out_features = 1).
        if mxu_head:
            # v5-style: push the matvec onto the MXU (VALU is the binding slot).
            q8 = jnp.dot(w3_ref[...], h2.astype(jnp.bfloat16),
                         preferred_element_type=jnp.float32)     # (8, TILE_B)
            q = q8[0:1, :] + b3_ref[...]
        else:
            # VPU multiply + sublane (XLU) reduce.
            q = jnp.sum(h2 * w3_ref[...], axis=0, keepdims=True) + b3_ref[...]
        o_ref[...] = q.astype(o_ref.dtype)

    return kernel


def _choose_tile(B, tile_cap, force_multi_tile):
    """Pick a lane-dense batch tile (multiple of 128) and the padded batch."""
    b128 = _round_up(max(B, 1), 128)
    n_tiles = _cdiv(b128, tile_cap)
    if force_multi_tile and b128 >= 256:
        n_tiles = max(n_tiles, 2)          # feed both v7x TensorCores
    tb = min(tile_cap, _round_up(_cdiv(b128, n_tiles), 128))
    b_pad = _round_up(max(B, 1), tb)
    return tb, b_pad


def critic_forward(state, action, params, *, tile_b=DEFAULT_TILE_B,
                   elem_dtype=None, mxu_head=None):
    """Q(state, action) -> (B, 1).  params = (w1, b1, w2, b2, w3, b3)."""
    w1, b1, w2, b2, w3, b3 = params
    chip = _chip_kind()
    if elem_dtype is None:
        # bf16 elementwise only where the VPU is bf16-native.
        elem_dtype = jnp.bfloat16 if chip in ("v6", "v7") else jnp.float32
    if mxu_head is None:
        mxu_head = chip not in ("v6", "v7")

    B = state.shape[0]
    # v7x: smaller VMEM (64 MiB) -> cap tile at 2048; others up to 4096.
    tile_cap = min(int(tile_b), 2048 if chip == "v7" else 4096)
    tile_cap = max(128, _round_up(tile_cap, 128))
    tb, b_pad = _choose_tile(B, tile_cap, force_multi_tile=(chip == "v7"))
    grid = (b_pad // tb,)

    # --- Wrapper-side layout plumbing (one concat + one transpose + one pad).
    # In a training loop keep the replay batch pre-transposed / pre-padded and
    # consume the (1, b_pad) output directly to remove these ops entirely.
    x = jnp.concatenate([state, action], axis=1).astype(jnp.float32).T  # (4, B)
    if b_pad != B:
        x = jnp.pad(x, ((0, 0), (0, b_pad - B)))

    # --- One-time param prep (cheap; pre-cast/store these in training code).
    w1k = w1.astype(elem_dtype)
    b1k = b1.astype(elem_dtype)
    w2k = w2.astype(jnp.bfloat16)            # cast ONCE here, not per grid step
    b2k = b2.astype(jnp.float32)
    if mxu_head:
        w3k = jnp.zeros((8, HIDDEN), jnp.bfloat16)
        w3k = w3k.at[0, :].set(w3[:, 0].astype(jnp.bfloat16))
    else:
        w3k = w3.astype(jnp.float32)
    b3k = b3.astype(jnp.float32)

    cp_kwargs = dict(dimension_semantics=("parallel",))   # megacore on v7x
    if chip != "v7":
        # 128 MiB physical VMEM chips: give headroom for the larger tiles.
        cp_kwargs["vmem_limit_bytes"] = 64 * 1024 * 1024

    out = pl.pallas_call(
        _make_critic_kernel(elem_dtype, mxu_head),
        out_shape=jax.ShapeDtypeStruct((1, b_pad), jnp.float32),
        grid=grid,
        in_specs=[
            pl.BlockSpec((IN_DIM, tb), lambda i: (0, i)),
            # Weights/biases: full-extent blocks, constant index -> VMEM-resident.
            pl.BlockSpec((HIDDEN, IN_DIM), lambda i: (0, 0)),
            pl.BlockSpec((HIDDEN, 1), lambda i: (0, 0)),
            pl.BlockSpec((HIDDEN, HIDDEN), lambda i: (0, 0)),
            pl.BlockSpec((HIDDEN, 1), lambda i: (0, 0)),
            pl.BlockSpec(w3k.shape, lambda i: (0, 0)),
            pl.BlockSpec((1, 1), lambda i: (0, 0)),
        ],
        out_specs=pl.BlockSpec((1, tb), lambda i: (0, i)),
        compiler_params=pltpu.CompilerParams(**cp_kwargs),
    )(x, w1k, b1k, w2k, b2k, w3k, b3k)

    # Padded columns hold garbage-but-finite values; slice them off.
    return out[0, :B].reshape(B, 1)


def init_params(key, state_dim=STATE_DIM, action_dim=ACTION_DIM, hidden=HIDDEN):
    """nn.Linear default init U(-1/sqrt(fan_in), 1/sqrt(fan_in)).

    Layout (kernel-friendly orientation, f32 canonical):
      w1 (H, state_dim+action_dim) = fc1.weight
      b1 (H, 1)
      w2 (H, H)                    = fc2.weight (PyTorch layout)
      b2 (H, 1)
      w3 (H, 1)                    = fc3.weight.T
      b3 (1, 1)
    """
    keys = jax.random.split(key, 6)

    def uni(k, shape, fan_in):
        bound = 1.0 / float(fan_in) ** 0.5
        return jax.random.uniform(k, shape, jnp.float32, minval=-bound, maxval=bound)

    fan1 = state_dim + action_dim
    w1 = uni(keys[0], (hidden, fan1), fan1)
    b1 = uni(keys[1], (hidden, 1), fan1)
    w2 = uni(keys[2], (hidden, hidden), hidden)
    b2 = uni(keys[3], (hidden, 1), hidden)
    w3 = uni(keys[4], (hidden, 1), hidden)
    b3 = uni(keys[5], (1, 1), hidden)
    return (w1, b1, w2, b2, w3, b3)


def critic_reference(state, action, params):
    """Pure-JAX f32 reference matching the PyTorch forward."""
    w1, b1, w2, b2, w3, b3 = params
    x = jnp.concatenate([state, action], axis=1)           # (B, 4)
    h = jax.nn.relu(x @ w1.T + b1[:, 0])
    h = jax.nn.relu(h @ w2.T + b2[:, 0])
    return h @ w3 + b3[0, 0]                               # (B, 1)


if __name__ == "__main__":
    key = jax.random.PRNGKey(0)
    kp, ks, ka, ks2, ka2 = jax.random.split(key, 5)
    params = init_params(kp)

    # bf16 MXU inputs (f32 accumulate) + optional bf16 layer-1 -> loosened tol.
    ATOL = RTOL = 3e-2

    # Small batch (pads to one 128-wide tile), auto (chip-selected) path.
    B = 8
    state = jax.random.normal(ks, (B, STATE_DIM), jnp.float32)
    action = jax.random.normal(ka, (B, ACTION_DIM), jnp.float32)
    out = jax.block_until_ready(critic_forward(state, action, params))
    ref = critic_reference(state, action, params)
    assert out.shape == (B, 1), out.shape
    assert jnp.allclose(out, ref, atol=ATOL, rtol=RTOL), (out, ref)

    # Non-multiple batch, auto path.
    B2 = 300
    state2 = jax.random.normal(ks2, (B2, STATE_DIM), jnp.float32)
    action2 = jax.random.normal(ka2, (B2, ACTION_DIM), jnp.float32)
    out2 = jax.block_until_ready(critic_forward(state2, action2, params))
    ref2 = critic_reference(state2, action2, params)
    assert out2.shape == (B2, 1), out2.shape
    assert jnp.allclose(out2, ref2, atol=ATOL, rtol=RTOL), (out2, ref2)

    # Conservative (v5-style) path: f32 elementwise + MXU head, small tile so
    # the multi-step grid (3 tiles) and padding are exercised on any chip.
    out3 = jax.block_until_ready(
        critic_forward(state2, action2, params,
                       tile_b=128, elem_dtype=jnp.float32, mxu_head=True))
    assert out3.shape == (B2, 1), out3.shape
    assert jnp.allclose(out3, ref2, atol=ATOL, rtol=RTOL), (out3, ref2)

    print("KERNEL_OK")
</pallas_src>

<mosaic_0001>
module attributes {stable_mosaic.version = 11 : i64} {
  func.func @kernel(%arg0: i32, %arg1: memref<4x128xf32, #tpu.memory_space<vmem>>, %arg2: memref<256x4xf32, #tpu.memory_space<vmem>>, %arg3: memref<256x1xf32, #tpu.memory_space<vmem>>, %arg4: memref<256x256xbf16, #tpu.memory_space<vmem>>, %arg5: memref<256x1xf32, #tpu.memory_space<vmem>>, %arg6: memref<8x256xbf16, #tpu.memory_space<vmem>>, %arg7: memref<1x1xf32, #tpu.memory_space<vmem>>, %arg8: memref<1x128xf32, #tpu.memory_space<vmem>>) attributes {dimension_semantics = [#tpu.dimension_semantics<parallel>], iteration_bounds = array<i64: 1>, scalar_prefetch = 0 : i64, scratch_operands = 0 : i64, tpu.core_type = #tpu.core_type<tc>, window_params = [{transform_indices = @transform_0, window_bounds = array<i64: 4, 128>}, {pipeline_mode = #tpu.pipeline_mode<synchronous>, transform_indices = @transform_1, window_bounds = array<i64: 256, 4>}, {pipeline_mode = #tpu.pipeline_mode<synchronous>, transform_indices = @transform_2, window_bounds = array<i64: 256, 1>}, {pipeline_mode = #tpu.pipeline_mode<synchronous>, transform_indices = @transform_3, window_bounds = array<i64: 256, 256>}, {pipeline_mode = #tpu.pipeline_mode<synchronous>, transform_indices = @transform_4, window_bounds = array<i64: 256, 1>}, {pipeline_mode = #tpu.pipeline_mode<synchronous>, transform_indices = @transform_5, window_bounds = array<i64: 8, 256>}, {pipeline_mode = #tpu.pipeline_mode<synchronous>, transform_indices = @transform_6, window_bounds = array<i64: 1, 1>}, {transform_indices = @transform_7, window_bounds = array<i64: 1, 128>}]} {
    %c0 = arith.constant 0 : index
    %c0_0 = arith.constant 0 : index
    %0 = vector.load %arg1[%c0, %c0_0] : memref<4x128xf32, #tpu.memory_space<vmem>>, vector<4x128xf32>
    %c0_1 = arith.constant 0 : index
    %c0_2 = arith.constant 0 : index
    %1 = vector.load %arg2[%c0_1, %c0_2] : memref<256x4xf32, #tpu.memory_space<vmem>>, vector<256x4xf32>
    %c0_3 = arith.constant 0 : index
    %c0_4 = arith.constant 0 : index
    %2 = vector.load %arg3[%c0_3, %c0_4] : memref<256x1xf32, #tpu.memory_space<vmem>>, vector<256x1xf32>
    %3 = vector.extract_strided_slice %0 {offsets = [0, 0], sizes = [1, 128], strides = [1, 1]} : vector<4x128xf32> to vector<1x128xf32>
    %4 = vector.extract_strided_slice %1 {offsets = [0, 0], sizes = [256, 1], strides = [1, 1]} : vector<256x4xf32> to vector<256x1xf32>
    %5 = vector.broadcast %4 : vector<256x1xf32> to vector<256x128xf32>
    %6 = vector.broadcast %3 : vector<1x128xf32> to vector<256x128xf32>
    %7 = arith.mulf %5, %6 : vector<256x128xf32>
    %8 = vector.broadcast %2 : vector<256x1xf32> to vector<256x128xf32>
    %9 = arith.addf %8, %7 : vector<256x128xf32>
    %10 = vector.extract_strided_slice %0 {offsets = [1, 0], sizes = [1, 128], strides = [1, 1]} : vector<4x128xf32> to vector<1x128xf32>
    %11 = vector.extract_strided_slice %1 {offsets = [0, 1], sizes = [256, 1], strides = [1, 1]} : vector<256x4xf32> to vector<256x1xf32>
    %12 = vector.broadcast %11 : vector<256x1xf32> to vector<256x128xf32>
    %13 = vector.broadcast %10 : vector<1x128xf32> to vector<256x128xf32>
    %14 = arith.mulf %12, %13 : vector<256x128xf32>
    %15 = arith.addf %9, %14 : vector<256x128xf32>
    %16 = vector.extract_strided_slice %0 {offsets = [2, 0], sizes = [1, 128], strides = [1, 1]} : vector<4x128xf32> to vector<1x128xf32>
    %17 = vector.extract_strided_slice %1 {offsets = [0, 2], sizes = [256, 1], strides = [1, 1]} : vector<256x4xf32> to vector<256x1xf32>
    %18 = vector.broadcast %17 : vector<256x1xf32> to vector<256x128xf32>
    %19 = vector.broadcast %16 : vector<1x128xf32> to vector<256x128xf32>
    %20 = arith.mulf %18, %19 : vector<256x128xf32>
    %21 = arith.addf %15, %20 : vector<256x128xf32>
    %22 = vector.extract_strided_slice %0 {offsets = [3, 0], sizes = [1, 128], strides = [1, 1]} : vector<4x128xf32> to vector<1x128xf32>
    %23 = vector.extract_strided_slice %1 {offsets = [0, 3], sizes = [256, 1], strides = [1, 1]} : vector<256x4xf32> to vector<256x1xf32>
    %24 = vector.broadcast %23 : vector<256x1xf32> to vector<256x128xf32>
    %25 = vector.broadcast %22 : vector<1x128xf32> to vector<256x128xf32>
    %26 = arith.mulf %24, %25 : vector<256x128xf32>
    %27 = arith.addf %21, %26 : vector<256x128xf32>
    %cst = arith.constant 0.000000e+00 : f32
    %28 = vector.broadcast %cst : f32 to vector<256x128xf32>
    %29 = arith.maximumf %27, %28 : vector<256x128xf32>
    %30 = arith.truncf %29 : vector<256x128xf32> to vector<256x128xbf16>
    %c0_5 = arith.constant 0 : index
    %c0_6 = arith.constant 0 : index
    %31 = vector.load %arg4[%c0_5, %c0_6] : memref<256x256xbf16, #tpu.memory_space<vmem>>, vector<256x256xbf16>
    %cst_7 = arith.constant dense<0.000000e+00> : vector<256x128xf32>
    %32 = tpu.matmul %31, %30, %cst_7 {dimension_numbers = #tpu.dot_dimension_numbers<[1], [0], [0], [1], [0, 0, 1, 1], [], []>} : vector<256x256xbf16>, vector<256x128xbf16>, vector<256x128xf32> -> vector<256x128xf32>
    %c0_8 = arith.constant 0 : index
    %c0_9 = arith.constant 0 : index
    %33 = vector.load %arg5[%c0_8, %c0_9] : memref<256x1xf32, #tpu.memory_space<vmem>>, vector<256x1xf32>
    %34 = vector.broadcast %33 : vector<256x1xf32> to vector<256x128xf32>
    %35 = arith.addf %32, %34 : vector<256x128xf32>
    %cst_10 = arith.constant 0.000000e+00 : f32
    %36 = vector.broadcast %cst_10 : f32 to vector<256x128xf32>
    %37 = arith.maximumf %35, %36 : vector<256x128xf32>
    %c0_11 = arith.constant 0 : index
    %c0_12 = arith.constant 0 : index
    %38 = vector.load %arg6[%c0_11, %c0_12] : memref<8x256xbf16, #tpu.memory_space<vmem>>, vector<8x256xbf16>
    %39 = arith.truncf %37 : vector<256x128xf32> to vector<256x128xbf16>
    %cst_13 = arith.constant dense<0.000000e+00> : vector<8x128xf32>
    %40 = tpu.matmul %38, %39, %cst_13 {dimension_numbers = #tpu.dot_dimension_numbers<[1], [0], [0], [1], [0, 0, 1, 1], [], []>} : vector<8x256xbf16>, vector<256x128xbf16>, vector<8x128xf32> -> vector<8x128xf32>
    %41 = vector.extract_strided_slice %40 {offsets = [0, 0], sizes = [1, 128], strides = [1, 1]} : vector<8x128xf32> to vector<1x128xf32>
    %c0_14 = arith.constant 0 : index
    %c0_15 = arith.constant 0 : index
    %42 = vector.load %arg7[%c0_14, %c0_15] : memref<1x1xf32, #tpu.memory_space<vmem>>, vector<1x1xf32>
    %43 = vector.broadcast %42 : vector<1x1xf32> to vector<1x128xf32>
    %44 = arith.addf %41, %43 : vector<1x128xf32>
    %c0_16 = arith.constant 0 : index
    %c0_17 = arith.constant 0 : index
    %45 = vector.load %arg8[%c0_16, %c0_17] : memref<1x128xf32, #tpu.memory_space<vmem>>, vector<1x128xf32>
    tpu.vector_store %arg8[%c0_16, %c0_17], %44 {strides = array<i32>} : memref<1x128xf32, #tpu.memory_space<vmem>>, vector<1x128xf32>,
    return
  }
  func.func @transform_0(%arg0: i32) -> (i32, i32) {
    %c0_i32 = arith.constant 0 : i32
    %c0_i32_0 = arith.constant 0 : i32
    return %c0_i32, %arg0 : i32, i32
  }
  func.func @transform_1(%arg0: i32) -> (i32, i32) {
    %c0_i32 = arith.constant 0 : i32
    %c0_i32_0 = arith.constant 0 : i32
    %c0_i32_1 = arith.constant 0 : i32
    return %c0_i32, %c0_i32_0 : i32, i32
  }
  func.func @transform_2(%arg0: i32) -> (i32, i32) {
    %c0_i32 = arith.constant 0 : i32
    %c0_i32_0 = arith.constant 0 : i32
    %c0_i32_1 = arith.constant 0 : i32
    return %c0_i32, %c0_i32_0 : i32, i32
  }
  func.func @transform_3(%arg0: i32) -> (i32, i32) {
    %c0_i32 = arith.constant 0 : i32
    %c0_i32_0 = arith.constant 0 : i32
    %c0_i32_1 = arith.constant 0 : i32
    return %c0_i32, %c0_i32_0 : i32, i32
  }
  func.func @transform_4(%arg0: i32) -> (i32, i32) {
    %c0_i32 = arith.constant 0 : i32
    %c0_i32_0 = arith.constant 0 : i32
    %c0_i32_1 = arith.constant 0 : i32
    return %c0_i32, %c0_i32_0 : i32, i32
  }
  func.func @transform_5(%arg0: i32) -> (i32, i32) {
    %c0_i32 = arith.constant 0 : i32
    %c0_i32_0 = arith.constant 0 : i32
    %c0_i32_1 = arith.constant 0 : i32
    return %c0_i32, %c0_i32_0 : i32, i32
  }
  func.func @transform_6(%arg0: i32) -> (i32, i32) {
    %c0_i32 = arith.constant 0 : i32
    %c0_i32_0 = arith.constant 0 : i32
    %c0_i32_1 = arith.constant 0 : i32
    return %c0_i32, %c0_i32_0 : i32, i32
  }
  func.func @transform_7(%arg0: i32) -> (i32, i32) {
    %c0_i32 = arith.constant 0 : i32
    %c0_i32_0 = arith.constant 0 : i32
    return %c0_i32, %arg0 : i32, i32
  }
}

</mosaic_0001>

<llo_original>
// kernel: tpu_custom_call.1
$region0: #{tpu_custom_call.1}
  #allocation0 [shape = 'u32[]', space=smem, size = 0x4, offset = 0x4, fixed_abs, tag = 'smem constant byte address 0x4 - core index']
  #allocation1 [shape = 'u32[144,128]{1,0:T(1,128)}', space=vmem, size = 0x12000, scoped, tag = 'internal scratch']
  #allocation2 [shape = 'f32[1,1]{1,0:T(1,128)S(1)}', space=vmem, size = 0x200, scoped, tag = 'scoped memory for tpu_custom_call.1']
  %s0 = inlined_call_operand.hbm [shape: f32[4,128], index: 0, kind: input, shape index: {}]
  %s1 = inlined_call_operand.hbm [shape: f32[256,4], index: 1, kind: input, shape index: {}]
  %s2 = inlined_call_operand.hbm [shape: f32[256,1], index: 2, kind: input, shape index: {}]
  %s3 = inlined_call_operand.hbm [shape: bf16[256,256], index: 3, kind: input, shape index: {}]
  %s4 = inlined_call_operand.hbm [shape: f32[256,1], index: 4, kind: input, shape index: {}]
  %s5 = inlined_call_operand.hbm [shape: bf16[8,256], index: 5, kind: input, shape index: {}]
  %s6 = inlined_call_operand.<no memory space> [shape: f32[1,1], index: 6, kind: input, shape index: {}]
  %s7 = inlined_call_operand.hbm [shape: f32[1,128], index: 7, kind: output, shape index: {}]
  %s8 = sld [smem:[#allocation0]]
  $region62: #{tpu_custom_call.1} parent=0
    _
  %s10 = ssub.s32 1, %s8
  %s11 = scalar_select 0, %s10, %s8
  %v12 = vstv %s6
  %13 = vst [vmem:[#allocation2] sm:$0x1] %v12
  $region1: #{tpu_custom_call.1} parent=0
    #allocation3 [shape = 'u8[2048]{0}', space=vmem, size = 0x800, scoped, tag = 'input window, operand 0, single buffered']
    #allocation4 [shape = 's32[1]{0}', space=sflag, size = 0x4, scoped, tag = 'scoped memory for tpu_custom_call.1']
    #allocation5 [shape = 's32[1]{0}', space=sflag, size = 0x4, scoped, tag = 'scoped memory for tpu_custom_call.1']
    #allocation6 [shape = 'u8[131072]{0}', space=vmem, size = 0x20000, scoped, tag = 'input window, operand 1, single buffered']
    #allocation7 [shape = 's32[1]{0}', space=sflag, size = 0x4, scoped, tag = 'scoped memory for tpu_custom_call.1']
    #allocation8 [shape = 'u8[131072]{0}', space=vmem, size = 0x20000, scoped, tag = 'input window, operand 2, single buffered']
    #allocation9 [shape = 'u8[131072]{0}', space=vmem, size = 0x20000, scoped, tag = 'input window, operand 3, single buffered']
    #allocation10 [shape = 's32[1]{0}', space=sflag, size = 0x4, scoped, tag = 'scoped memory for tpu_custom_call.1']
    #allocation11 [shape = 'u8[131072]{0}', space=vmem, size = 0x20000, scoped, tag = 'input window, operand 4, single buffered']
    #allocation12 [shape = 'u8[4096]{0}', space=vmem, size = 0x1000, scoped, tag = 'input window, operand 5, single buffered']
    #allocation13 [shape = 's32[1]{0}', space=sflag, size = 0x4, scoped, tag = 'scoped memory for tpu_custom_call.1']
    #allocation14 [shape = 'u8[512]{0}', space=vmem, size = 0x400, scoped, tag = 'output window, operand 0, single buffered']
    %14 = vsyncpa [#allocation4], 0
    %15 = vsyncpa [#allocation7], 0
    %16 = vsyncpa [#allocation10], 0
    %17 = vsyncpa [#allocation13], 0
    %18 = vsyncpa [#allocation5], 0
    // Predicated region
    $region2: #{tpu_custom_call.1} parent=1 // pred_check
      _
    $region3: #{tpu_custom_call.1} parent=1 // pred_check_branch
      %20 = sbr.rel (0) target = $region5
    $region4: #{tpu_custom_call.1} parent=1 // pred_region
      %s22 = ssub.s32 64, 64
      %23 = vsyncadd [#allocation4], %s22
      %s25 = sshll.u32 [#allocation3], 4
      %s26 = int_to_ptr.vmem [resolvable:$true] %s25
      %28 = dma.hbm_to_vmem [thread:$0]  %s0, 64, %s26, [#allocation4]
    $region5: #{tpu_custom_call.1} parent=1 // pred_fallthru
      _
    // Predicated region
    $region6: #{tpu_custom_call.1} parent=1 // pred_check
      _
    $region7: #{tpu_custom_call.1} parent=1 // pred_check_branch
      %30 = sbr.rel (0) target = $region9
    $region8: #{tpu_custom_call.1} parent=1 // pred_region
      %s32 = ssub.s32 4096, 4096
      %33 = vsyncadd [#allocation7], %s32
      %s34 = sshll.u32 [#allocation6], 4
      %s35 = int_to_ptr.vmem [resolvable:$true] %s34
      %40 = dma.hbm_to_vmem [thread:$0]  %s1, 4096, %s35, [#allocation7], 128, 128, 8
    $region9: #{tpu_custom_call.1} parent=1 // pred_fallthru
      _
    // Predicated region
    $region10: #{tpu_custom_call.1} parent=1 // pred_check
      _
    $region11: #{tpu_custom_call.1} parent=1 // pred_check_branch
      %42 = sbr.rel (0) target = $region13
    $region12: #{tpu_custom_call.1} parent=1 // pred_region
      %s44 = ssub.s32 4096, 4096
      %45 = vsyncadd [#allocation7], %s44
      %s46 = sshll.u32 [#allocation8], 4
      %s47 = int_to_ptr.vmem [resolvable:$true] %s46
      %52 = dma.hbm_to_vmem [thread:$0]  %s2, 4096, %s47, [#allocation7], 128, 128, 8
    $region13: #{tpu_custom_call.1} parent=1 // pred_fallthru
      _
    // Predicated region
    $region14: #{tpu_custom_call.1} parent=1 // pred_check
      _
    $region15: #{tpu_custom_call.1} parent=1 // pred_check_branch
      %54 = sbr.rel (0) target = $region17
    $region16: #{tpu_custom_call.1} parent=1 // pred_region
      %s56 = ssub.s32 4096, 4096
      %57 = vsyncadd [#allocation10], %s56
      %s58 = sshll.u32 [#allocation9], 4
      %s59 = int_to_ptr.vmem [resolvable:$true] %s58
      %64 = dma.hbm_to_vmem [thread:$0]  %s3, 4096, %s59, [#allocation10], 128, 128, 8
    $region17: #{tpu_custom_call.1} parent=1 // pred_fallthru
      _
    // Predicated region
    $region18: #{tpu_custom_call.1} parent=1 // pred_check
      _
    $region19: #{tpu_custom_call.1} parent=1 // pred_check_branch
      %66 = sbr.rel (0) target = $region21
    $region20: #{tpu_custom_call.1} parent=1 // pred_region
      %s68 = ssub.s32 4096, 4096
      %69 = vsyncadd [#allocation10], %s68
      %s70 = sshll.u32 [#allocation11], 4
      %s71 = int_to_ptr.vmem [resolvable:$true] %s70
      %76 = dma.hbm_to_vmem [thread:$0]  %s4, 4096, %s71, [#allocation10], 128, 128, 8
    $region21: #{tpu_custom_call.1} parent=1 // pred_fallthru
      _
    // Predicated region
    $region22: #{tpu_custom_call.1} parent=1 // pred_check
      _
    $region23: #{tpu_custom_call.1} parent=1 // pred_check_branch
      %78 = sbr.rel (0) target = $region25
    $region24: #{tpu_custom_call.1} parent=1 // pred_region
      %s80 = ssub.s32 128, 128
      %81 = vsyncadd [#allocation13], %s80
      %s83 = sshll.u32 [#allocation12], 4
      %s84 = int_to_ptr.vmem [resolvable:$true] %s83
      %86 = dma.hbm_to_vmem [thread:$0]  %s5, 128, %s84, [#allocation13]
    $region25: #{tpu_custom_call.1} parent=1 // pred_fallthru
      _
    // Predicated region
    $region26: #{tpu_custom_call.1} parent=1 // pred_check
      _
    $region27: #{tpu_custom_call.1} parent=1 // pred_check_branch
      %88 = sbr.rel (0) target = $region29
    $region28: #{tpu_custom_call.1} parent=1 // pred_region
      _
    $region29: #{tpu_custom_call.1} parent=1 // pred_fallthru
      _
    // Predicated region
    $region30: #{tpu_custom_call.1} parent=1 // pred_check
      _
    $region31: #{tpu_custom_call.1} parent=1 // pred_check_branch
      %90 = sbr.rel (0) target = $region33
    $region32: #{tpu_custom_call.1} parent=1 // pred_region
      %91 = dma.done [#allocation4], 64
    $region33: #{tpu_custom_call.1} parent=1 // pred_fallthru
      _
    // Predicated region
    $region34: #{tpu_custom_call.1} parent=1 // pred_check
      _
    $region35: #{tpu_custom_call.1} parent=1 // pred_check_branch
      %93 = sbr.rel (0) target = $region37
    $region36: #{tpu_custom_call.1} parent=1 // pred_region
      %94 = dma.done [#allocation7], 4096
    $region37: #{tpu_custom_call.1} parent=1 // pred_fallthru
      _
    // Predicated region
    $region38: #{tpu_custom_call.1} parent=1 // pred_check
      _
    $region39: #{tpu_custom_call.1} parent=1 // pred_check_branch
      %96 = sbr.rel (0) target = $region41
    $region40: #{tpu_custom_call.1} parent=1 // pred_region
      %97 = dma.done [#allocation7], 4096
    $region41: #{tpu_custom_call.1} parent=1 // pred_fallthru
      _
    // Predicated region
    $region42: #{tpu_custom_call.1} parent=1 // pred_check
      _
    $region43: #{tpu_custom_call.1} parent=1 // pred_check_branch
      %99 = sbr.rel (0) target = $region45
    $region44: #{tpu_custom_call.1} parent=1 // pred_region
      %100 = dma.done [#allocation10], 4096
    $region45: #{tpu_custom_call.1} parent=1 // pred_fallthru
      _
    // Predicated region
    $region46: #{tpu_custom_call.1} parent=1 // pred_check
      _
    $region47: #{tpu_custom_call.1} parent=1 // pred_check_branch
      %102 = sbr.rel (0) target = $region49
    $region48: #{tpu_custom_call.1} parent=1 // pred_region
      %103 = dma.done [#allocation10], 4096
    $region49: #{tpu_custom_call.1} parent=1 // pred_fallthru
      _
    // Predicated region
    $region50: #{tpu_custom_call.1} parent=1 // pred_check
      _
    $region51: #{tpu_custom_call.1} parent=1 // pred_check_branch
      %105 = sbr.rel (0) target = $region53
    $region52: #{tpu_custom_call.1} parent=1 // pred_region
      %106 = dma.done [#allocation13], 128
    $region53: #{tpu_custom_call.1} parent=1 // pred_fallthru
      _
    %v108 = vld [vmem:[#allocation3] sm:$0xf]
    %v109 = vld [vmem:[#allocation6] sm:$0xff]
    %v110 = vld [vmem:[#allocation6 + $0x8] sm:$0xff]
    %v111 = vld [vmem:[#allocation6 + $0x10] sm:$0xff]
    %v112 = vld [vmem:[#allocation6 + $0x18] sm:$0xff]
    %v113 = vld [vmem:[#allocation6 + $0x20] sm:$0xff]
    %v114 = vld [vmem:[#allocation6 + $0x28] sm:$0xff]
    %v115 = vld [vmem:[#allocation6 + $0x30] sm:$0xff]
    %v116 = vld [vmem:[#allocation6 + $0x38] sm:$0xff]
    %v117 = vld [vmem:[#allocation6 + $0x40] sm:$0xff]
    %v118 = vld [vmem:[#allocation6 + $0x48] sm:$0xff]
    %v119 = vld [vmem:[#allocation6 + $0x50] sm:$0xff]
    %v120 = vld [vmem:[#allocation6 + $0x58] sm:$0xff]
    %v121 = vld [vmem:[#allocation6 + $0x60] sm:$0xff]
    %v122 = vld [vmem:[#allocation6 + $0x68] sm:$0xff]
    %v123 = vld [vmem:[#allocation6 + $0x70] sm:$0xff]
    %v124 = vld [vmem:[#allocation6 + $0x78] sm:$0xff]
    %v125 = vld [vmem:[#allocation6 + $0x80] sm:$0xff]
    %v126 = vld [vmem:[#allocation6 + $0x88] sm:$0xff]
    %v127 = vld [vmem:[#allocation6 + $0x90] sm:$0xff]
    %v128 = vld [vmem:[#allocation6 + $0x98] sm:$0xff]
    %v129 = vld [vmem:[#allocation6 + $0xa0] sm:$0xff]
    %v130 = vld [vmem:[#allocation6 + $0xa8] sm:$0xff]
    %v131 = vld [vmem:[#allocation6 + $0xb0] sm:$0xff]
    %v132 = vld [vmem:[#allocation6 + $0xb8] sm:$0xff]
    %v133 = vld [vmem:[#allocation6 + $0xc0] sm:$0xff]
    %v134 = vld [vmem:[#allocation6 + $0xc8] sm:$0xff]
    %v135 = vld [vmem:[#allocation6 + $0xd0] sm:$0xff]
    %v136 = vld [vmem:[#allocation6 + $0xd8] sm:$0xff]
    %v137 = vld [vmem:[#allocation6 + $0xe0] sm:$0xff]
    %v138 = vld [vmem:[#allocation6 + $0xe8] sm:$0xff]
    %v139 = vld [vmem:[#allocation6 + $0xf0] sm:$0xff]
    %v140 = vld [vmem:[#allocation6 + $0xf8] sm:$0xff]
    %v141 = vld [vmem:[#allocation8] sm:$0xff]
    %v142 = vld [vmem:[#allocation8 + $0x8] sm:$0xff]
    %v143 = vld [vmem:[#allocation8 + $0x10] sm:$0xff]
    %v144 = vld [vmem:[#allocation8 + $0x18] sm:$0xff]
    %v145 = vld [vmem:[#allocation8 + $0x20] sm:$0xff]
    %v146 = vld [vmem:[#allocation8 + $0x28] sm:$0xff]
    %v147 = vld [vmem:[#allocation8 + $0x30] sm:$0xff]
    %v148 = vld [vmem:[#allocation8 + $0x38] sm:$0xff]
    %v149 = vld [vmem:[#allocation8 + $0x40] sm:$0xff]
    %v150 = vld [vmem:[#allocation8 + $0x48] sm:$0xff]
    %v151 = vld [vmem:[#allocation8 + $0x50] sm:$0xff]
    %v152 = vld [vmem:[#allocation8 + $0x58] sm:$0xff]
    %v153 = vld [vmem:[#allocation8 + $0x60] sm:$0xff]
    %v154 = vld [vmem:[#allocation8 + $0x68] sm:$0xff]
    %v155 = vld [vmem:[#allocation8 + $0x70] sm:$0xff]
    %v156 = vld [vmem:[#allocation8 + $0x78] sm:$0xff]
    %v157 = vld [vmem:[#allocation8 + $0x80] sm:$0xff]
    %v158 = vld [vmem:[#allocation8 + $0x88] sm:$0xff]
    %v159 = vld [vmem:[#allocation8 + $0x90] sm:$0xff]
    %v160 = vld [vmem:[#allocation8 + $0x98] sm:$0xff]
    %v161 = vld [vmem:[#allocation8 + $0xa0] sm:$0xff]
    %v162 = vld [vmem:[#allocation8 + $0xa8] sm:$0xff]
    %v163 = vld [vmem:[#allocation8 + $0xb0] sm:$0xff]
    %v164 = vld [vmem:[#allocation8 + $0xb8] sm:$0xff]
    %v165 = vld [vmem:[#allocation8 + $0xc0] sm:$0xff]
    %v166 = vld [vmem:[#allocation8 + $0xc8] sm:$0xff]
    %v167 = vld [vmem:[#allocation8 + $0xd0] sm:$0xff]
    %v168 = vld [vmem:[#allocation8 + $0xd8] sm:$0xff]
    %v169 = vld [vmem:[#allocation8 + $0xe0] sm:$0xff]
    %v170 = vld [vmem:[#allocation8 + $0xe8] sm:$0xff]
    %v171 = vld [vmem:[#allocation8 + $0xf0] sm:$0xff]
    %v172 = vld [vmem:[#allocation8 + $0xf8] sm:$0xff]
    %174 = vset.pattern.permute.xlu0 0
    %175 = vperm.xlu0 %174, %v109
    %v176 = vpop.permute.xlu0 %175
    %179 = vset.pattern.permute.xlu0 0
    %180 = vperm.xlu0 %179, %v110
    %v181 = vpop.permute.xlu0 %180
    %184 = vset.pattern.permute.xlu0 0
    %185 = vperm.xlu0 %184, %v111
    %v186 = vpop.permute.xlu0 %185
    %189 = vset.pattern.permute.xlu0 0
    %190 = vperm.xlu0 %189, %v112
    %v191 = vpop.permute.xlu0 %190
    %194 = vset.pattern.permute.xlu0 0
    %195 = vperm.xlu0 %194, %v113
    %v196 = vpop.permute.xlu0 %195
    %199 = vset.pattern.permute.xlu0 0
    %200 = vperm.xlu0 %199, %v114
    %v201 = vpop.permute.xlu0 %200
    %204 = vset.pattern.permute.xlu0 0
    %205 = vperm.xlu0 %204, %v115
    %v206 = vpop.permute.xlu0 %205
    %209 = vset.pattern.permute.xlu0 0
    %210 = vperm.xlu0 %209, %v116
    %v211 = vpop.permute.xlu0 %210
    %214 = vset.pattern.permute.xlu0 0
    %215 = vperm.xlu0 %214, %v117
    %v216 = vpop.permute.xlu0 %215
    %219 = vset.pattern.permute.xlu0 0
    %220 = vperm.xlu0 %219, %v118
    %v221 = vpop.permute.xlu0 %220
    %224 = vset.pattern.permute.xlu0 0
    %225 = vperm.xlu0 %224, %v119
    %v226 = vpop.permute.xlu0 %225
    %229 = vset.pattern.permute.xlu0 0
    %230 = vperm.xlu0 %229, %v120
    %v231 = vpop.permute.xlu0 %230
    %234 = vset.pattern.permute.xlu0 0
    %235 = vperm.xlu0 %234, %v121
    %v236 = vpop.permute.xlu0 %235
    %239 = vset.pattern.permute.xlu0 0
    %240 = vperm.xlu0 %239, %v122
    %v241 = vpop.permute.xlu0 %240
    %244 = vset.pattern.permute.xlu0 0
    %245 = vperm.xlu0 %244, %v123
    %v246 = vpop.permute.xlu0 %245
    %249 = vset.pattern.permute.xlu0 0
    %250 = vperm.xlu0 %249, %v124
    %v251 = vpop.permute.xlu0 %250
    %254 = vset.pattern.permute.xlu0 0
    %255 = vperm.xlu0 %254, %v125
    %v256 = vpop.permute.xlu0 %255
    %259 = vset.pattern.permute.xlu0 0
    %260 = vperm.xlu0 %259, %v126
    %v261 = vpop.permute.xlu0 %260
    %264 = vset.pattern.permute.xlu0 0
    %265 = vperm.xlu0 %264, %v127
    %v266 = vpop.permute.xlu0 %265
    %269 = vset.pattern.permute.xlu0 0
    %270 = vperm.xlu0 %269, %v128
    %v271 = vpop.permute.xlu0 %270
    %274 = vset.pattern.permute.xlu0 0
    %275 = vperm.xlu0 %274, %v129
    %v276 = vpop.permute.xlu0 %275
    %279 = vset.pattern.permute.xlu0 0
    %280 = vperm.xlu0 %279, %v130
    %v281 = vpop.permute.xlu0 %280
    %284 = vset.pattern.permute.xlu0 0
    %285 = vperm.xlu0 %284, %v131
    %v286 = vpop.permute.xlu0 %285
    %289 = vset.pattern.permute.xlu0 0
    %290 = vperm.xlu0 %289, %v132
    %v291 = vpop.permute.xlu0 %290
    %294 = vset.pattern.permute.xlu0 0
    %295 = vperm.xlu0 %294, %v133
    %v296 = vpop.permute.xlu0 %295
    %299 = vset.pattern.permute.xlu0 0
    %300 = vperm.xlu0 %299, %v134
    %v301 = vpop.permute.xlu0 %300
    %304 = vset.pattern.permute.xlu0 0
    %305 = vperm.xlu0 %304, %v135
    %v306 = vpop.permute.xlu0 %305
    %309 = vset.pattern.permute.xlu0 0
    %310 = vperm.xlu0 %309, %v136
    %v311 = vpop.permute.xlu0 %310
    %314 = vset.pattern.permute.xlu0 0
    %315 = vperm.xlu0 %314, %v137
    %v316 = vpop.permute.xlu0 %315
    %319 = vset.pattern.permute.xlu0 0
    %320 = vperm.xlu0 %319, %v138
    %v321 = vpop.permute.xlu0 %320
    %324 = vset.pattern.permute.xlu0 0
    %325 = vperm.xlu0 %324, %v139
    %v326 = vpop.permute.xlu0 %325
    %329 = vset.pattern.permute.xlu0 0
    %330 = vperm.xlu0 %329, %v140
    %v331 = vpop.permute.xlu0 %330
    %v333 = vlaneseq
    %v334 = vshrl.u32 %v333, 7
    %v335 = vsub.s32 0, %v334
    %v336 = vrot.slane %v108, %v335
    %v337 = vmul.f32 %v176, %v336
    %v338 = vmul.f32 %v181, %v336
    %v339 = vmul.f32 %v186, %v336
    %v340 = vmul.f32 %v191, %v336
    %v341 = vmul.f32 %v196, %v336
    %v342 = vmul.f32 %v201, %v336
    %v343 = vmul.f32 %v206, %v336
    %v344 = vmul.f32 %v211, %v336
    %v345 = vmul.f32 %v216, %v336
    %v346 = vmul.f32 %v221, %v336
    %v347 = vmul.f32 %v226, %v336
    %v348 = vmul.f32 %v231, %v336
    %v349 = vmul.f32 %v236, %v336
    %v350 = vmul.f32 %v241, %v336
    %v351 = vmul.f32 %v246, %v336
    %v352 = vmul.f32 %v251, %v336
    %v353 = vmul.f32 %v256, %v336
    %v354 = vmul.f32 %v261, %v336
    %v355 = vmul.f32 %v266, %v336
    %v356 = vmul.f32 %v271, %v336
    %v357 = vmul.f32 %v276, %v336
    %v358 = vmul.f32 %v281, %v336
    %v359 = vmul.f32 %v286, %v336
    %v360 = vmul.f32 %v291, %v336
    %v361 = vmul.f32 %v296, %v336
    %v362 = vmul.f32 %v301, %v336
    %v363 = vmul.f32 %v306, %v336
    %v364 = vmul.f32 %v311, %v336
    %v365 = vmul.f32 %v316, %v336
    %v366 = vmul.f32 %v321, %v336
    %v367 = vmul.f32 %v326, %v336
    %v368 = vmul.f32 %v331, %v336
    %370 = vset.pattern.permute.xlu0 0
    %371 = vperm.xlu0 %370, %v141
    %v372 = vpop.permute.xlu0 %371
    %375 = vset.pattern.permute.xlu0 0
    %376 = vperm.xlu0 %375, %v142
    %v377 = vpop.permute.xlu0 %376
    %380 = vset.pattern.permute.xlu0 0
    %381 = vperm.xlu0 %380, %v143
    %v382 = vpop.permute.xlu0 %381
    %385 = vset.pattern.permute.xlu0 0
    %386 = vperm.xlu0 %385, %v144
    %v387 = vpop.permute.xlu0 %386
    %390 = vset.pattern.permute.xlu0 0
    %391 = vperm.xlu0 %390, %v145
    %v392 = vpop.permute.xlu0 %391
    %395 = vset.pattern.permute.xlu0 0
    %396 = vperm.xlu0 %395, %v146
    %v397 = vpop.permute.xlu0 %396
    %400 = vset.pattern.permute.xlu0 0
    %401 = vperm.xlu0 %400, %v147
    %v402 = vpop.permute.xlu0 %401
    %405 = vset.pattern.permute.xlu0 0
    %406 = vperm.xlu0 %405, %v148
    %v407 = vpop.permute.xlu0 %406
    %410 = vset.pattern.permute.xlu0 0
    %411 = vperm.xlu0 %410, %v149
    %v412 = vpop.permute.xlu0 %411
    %415 = vset.pattern.permute.xlu0 0
    %416 = vperm.xlu0 %415, %v150
    %v417 = vpop.permute.xlu0 %416
    %420 = vset.pattern.permute.xlu0 0
    %421 = vperm.xlu0 %420, %v151
    %v422 = vpop.permute.xlu0 %421
    %425 = vset.pattern.permute.xlu0 0
    %426 = vperm.xlu0 %425, %v152
    %v427 = vpop.permute.xlu0 %426
    %430 = vset.pattern.permute.xlu0 0
    %431 = vperm.xlu0 %430, %v153
    %v432 = vpop.permute.xlu0 %431
    %435 = vset.pattern.permute.xlu0 0
    %436 = vperm.xlu0 %435, %v154
    %v437 = vpop.permute.xlu0 %436
    %440 = vset.pattern.permute.xlu0 0
    %441 = vperm.xlu0 %440, %v155
    %v442 = vpop.permute.xlu0 %441
    %445 = vset.pattern.permute.xlu0 0
    %446 = vperm.xlu0 %445, %v156
    %v447 = vpop.permute.xlu0 %446
    %450 = vset.pattern.permute.xlu0 0
    %451 = vperm.xlu0 %450, %v157
    %v452 = vpop.permute.xlu0 %451
    %455 = vset.pattern.permute.xlu0 0
    %456 = vperm.xlu0 %455, %v158
    %v457 = vpop.permute.xlu0 %456
    %460 = vset.pattern.permute.xlu0 0
    %461 = vperm.xlu0 %460, %v159
    %v462 = vpop.permute.xlu0 %461
    %465 = vset.pattern.permute.xlu0 0
    %466 = vperm.xlu0 %465, %v160
    %v467 = vpop.permute.xlu0 %466
    %470 = vset.pattern.permute.xlu0 0
    %471 = vperm.xlu0 %470, %v161
    %v472 = vpop.permute.xlu0 %471
    %475 = vset.pattern.permute.xlu0 0
    %476 = vperm.xlu0 %475, %v162
    %v477 = vpop.permute.xlu0 %476
    %480 = vset.pattern.permute.xlu0 0
    %481 = vperm.xlu0 %480, %v163
    %v482 = vpop.permute.xlu0 %481
    %485 = vset.pattern.permute.xlu0 0
    %486 = vperm.xlu0 %485, %v164
    %v487 = vpop.permute.xlu0 %486
    %490 = vset.pattern.permute.xlu0 0
    %491 = vperm.xlu0 %490, %v165
    %v492 = vpop.permute.xlu0 %491
    %495 = vset.pattern.permute.xlu0 0
    %496 = vperm.xlu0 %495, %v166
    %v497 = vpop.permute.xlu0 %496
    %500 = vset.pattern.permute.xlu0 0
    %501 = vperm.xlu0 %500, %v167
    %v502 = vpop.permute.xlu0 %501
    %505 = vset.pattern.permute.xlu0 0
    %506 = vperm.xlu0 %505, %v168
    %v507 = vpop.permute.xlu0 %506
    %510 = vset.pattern.permute.xlu0 0
    %511 = vperm.xlu0 %510, %v169
    %v512 = vpop.permute.xlu0 %511
    %515 = vset.pattern.permute.xlu0 0
    %516 = vperm.xlu0 %515, %v170
    %v517 = vpop.permute.xlu0 %516
    %520 = vset.pattern.permute.xlu0 0
    %521 = vperm.xlu0 %520, %v171
    %v522 = vpop.permute.xlu0 %521
    %525 = vset.pattern.permute.xlu0 0
    %526 = vperm.xlu0 %525, %v172
    %v527 = vpop.permute.xlu0 %526
    %v529 = vadd.f32 %v372, %v337
    %v530 = vadd.f32 %v377, %v338
    %v531 = vadd.f32 %v382, %v339
    %v532 = vadd.f32 %v387, %v340
    %v533 = vadd.f32 %v392, %v341
    %v534 = vadd.f32 %v397, %v342
    %v535 = vadd.f32 %v402, %v343
    %v536 = vadd.f32 %v407, %v344
    %v537 = vadd.f32 %v412, %v345
    %v538 = vadd.f32 %v417, %v346
    %v539 = vadd.f32 %v422, %v347
    %v540 = vadd.f32 %v427, %v348
    %v541 = vadd.f32 %v432, %v349
    %v542 = vadd.f32 %v437, %v350
    %v543 = vadd.f32 %v442, %v351
    %v544 = vadd.f32 %v447, %v352
    %v545 = vadd.f32 %v452, %v353
    %v546 = vadd.f32 %v457, %v354
    %v547 = vadd.f32 %v462, %v355
    %v548 = vadd.f32 %v467, %v356
    %v549 = vadd.f32 %v472, %v357
    %v550 = vadd.f32 %v477, %v358
    %v551 = vadd.f32 %v482, %v359
    %v552 = vadd.f32 %v487, %v360
    %v553 = vadd.f32 %v492, %v361
    %v554 = vadd.f32 %v497, %v362
    %v555 = vadd.f32 %v502, %v363
    %v556 = vadd.f32 %v507, %v364
    %v557 = vadd.f32 %v512, %v365
    %v558 = vadd.f32 %v517, %v366
    %v559 = vadd.f32 %v522, %v367
    %v560 = vadd.f32 %v527, %v368
    %561 = vset.pattern.permute.xlu0 1
    %562 = vperm.xlu0 %561, %v109
    %v563 = vpop.permute.xlu0 %562
    %565 = vset.pattern.permute.xlu0 1
    %566 = vperm.xlu0 %565, %v110
    %v567 = vpop.permute.xlu0 %566
    %569 = vset.pattern.permute.xlu0 1
    %570 = vperm.xlu0 %569, %v111
    %v571 = vpop.permute.xlu0 %570
    %573 = vset.pattern.permute.xlu0 1
    %574 = vperm.xlu0 %573, %v112
    %v575 = vpop.permute.xlu0 %574
    %577 = vset.pattern.permute.xlu0 1
    %578 = vperm.xlu0 %577, %v113
    %v579 = vpop.permute.xlu0 %578
    %581 = vset.pattern.permute.xlu0 1
    %582 = vperm.xlu0 %581, %v114
    %v583 = vpop.permute.xlu0 %582
    %585 = vset.pattern.permute.xlu0 1
    %586 = vperm.xlu0 %585, %v115
    %v587 = vpop.permute.xlu0 %586
    %589 = vset.pattern.permute.xlu0 1
    %590 = vperm.xlu0 %589, %v116
    %v591 = vpop.permute.xlu0 %590
    %593 = vset.pattern.permute.xlu0 1
    %594 = vperm.xlu0 %593, %v117
    %v595 = vpop.permute.xlu0 %594
    %597 = vset.pattern.permute.xlu0 1
    %598 = vperm.xlu0 %597, %v118
    %v599 = vpop.permute.xlu0 %598
    %601 = vset.pattern.permute.xlu0 1
    %602 = vperm.xlu0 %601, %v119
    %v603 = vpop.permute.xlu0 %602
    %605 = vset.pattern.permute.xlu0 1
    %606 = vperm.xlu0 %605, %v120
    %v607 = vpop.permute.xlu0 %606
    %609 = vset.pattern.permute.xlu0 1
    %610 = vperm.xlu0 %609, %v121
    %v611 = vpop.permute.xlu0 %610
    %613 = vset.pattern.permute.xlu0 1
    %614 = vperm.xlu0 %613, %v122
    %v615 = vpop.permute.xlu0 %614
    %617 = vset.pattern.permute.xlu0 1
    %618 = vperm.xlu0 %617, %v123
    %v619 = vpop.permute.xlu0 %618
    %621 = vset.pattern.permute.xlu0 1
    %622 = vperm.xlu0 %621, %v124
    %v623 = vpop.permute.xlu0 %622
    %625 = vset.pattern.permute.xlu0 1
    %626 = vperm.xlu0 %625, %v125
    %v627 = vpop.permute.xlu0 %626
    %629 = vset.pattern.permute.xlu0 1
    %630 = vperm.xlu0 %629, %v126
    %v631 = vpop.permute.xlu0 %630
    %633 = vset.pattern.permute.xlu0 1
    %634 = vperm.xlu0 %633, %v127
    %v635 = vpop.permute.xlu0 %634
    %637 = vset.pattern.permute.xlu0 1
    %638 = vperm.xlu0 %637, %v128
    %v639 = vpop.permute.xlu0 %638
    %641 = vset.pattern.permute.xlu0 1
    %642 = vperm.xlu0 %641, %v129
    %v643 = vpop.permute.xlu0 %642
    %645 = vset.pattern.permute.xlu0 1
    %646 = vperm.xlu0 %645, %v130
    %v647 = vpop.permute.xlu0 %646
    %649 = vset.pattern.permute.xlu0 1
    %650 = vperm.xlu0 %649, %v131
    %v651 = vpop.permute.xlu0 %650
    %653 = vset.pattern.permute.xlu0 1
    %654 = vperm.xlu0 %653, %v132
    %v655 = vpop.permute.xlu0 %654
    %657 = vset.pattern.permute.xlu0 1
    %658 = vperm.xlu0 %657, %v133
    %v659 = vpop.permute.xlu0 %658
    %661 = vset.pattern.permute.xlu0 1
    %662 = vperm.xlu0 %661, %v134
    %v663 = vpop.permute.xlu0 %662
    %665 = vset.pattern.permute.xlu0 1
    %666 = vperm.xlu0 %665, %v135
    %v667 = vpop.permute.xlu0 %666
    %669 = vset.pattern.permute.xlu0 1
    %670 = vperm.xlu0 %669, %v136
    %v671 = vpop.permute.xlu0 %670
    %673 = vset.pattern.permute.xlu0 1
    %674 = vperm.xlu0 %673, %v137
    %v675 = vpop.permute.xlu0 %674
    %677 = vset.pattern.permute.xlu0 1
    %678 = vperm.xlu0 %677, %v138
    %v679 = vpop.permute.xlu0 %678
    %681 = vset.pattern.permute.xlu0 1
    %682 = vperm.xlu0 %681, %v139
    %v683 = vpop.permute.xlu0 %682
    %685 = vset.pattern.permute.xlu0 1
    %686 = vperm.xlu0 %685, %v140
    %v687 = vpop.permute.xlu0 %686
    %v689 = vlaneseq
    %v690 = vshrl.u32 %v689, 7
    %v691 = vsub.s32 1, %v690
    %v692 = vrot.slane %v108, %v691
    %v693 = vmul.f32 %v563, %v692
    %v694 = vmul.f32 %v567, %v692
    %v695 = vmul.f32 %v571, %v692
    %v696 = vmul.f32 %v575, %v692
    %v697 = vmul.f32 %v579, %v692
    %v698 = vmul.f32 %v583, %v692
    %v699 = vmul.f32 %v587, %v692
    %v700 = vmul.f32 %v591, %v692
    %v701 = vmul.f32 %v595, %v692
    %v702 = vmul.f32 %v599, %v692
    %v703 = vmul.f32 %v603, %v692
    %v704 = vmul.f32 %v607, %v692
    %v705 = vmul.f32 %v611, %v692
    %v706 = vmul.f32 %v615, %v692
    %v707 = vmul.f32 %v619, %v692
    %v708 = vmul.f32 %v623, %v692
    %v709 = vmul.f32 %v627, %v692
    %v710 = vmul.f32 %v631, %v692
    %v711 = vmul.f32 %v635, %v692
    %v712 = vmul.f32 %v639, %v692
    %v713 = vmul.f32 %v643, %v692
    %v714 = vmul.f32 %v647, %v692
    %v715 = vmul.f32 %v651, %v692
    %v716 = vmul.f32 %v655, %v692
    %v717 = vmul.f32 %v659, %v692
    %v718 = vmul.f32 %v663, %v692
    %v719 = vmul.f32 %v667, %v692
    %v720 = vmul.f32 %v671, %v692
    %v721 = vmul.f32 %v675, %v692
    %v722 = vmul.f32 %v679, %v692
    %v723 = vmul.f32 %v683, %v692
    %v724 = vmul.f32 %v687, %v692
    %v725 = vadd.f32 %v529, %v693
    %v726 = vadd.f32 %v530, %v694
    %v727 = vadd.f32 %v531, %v695
    %v728 = vadd.f32 %v532, %v696
    %v729 = vadd.f32 %v533, %v697
    %v730 = vadd.f32 %v534, %v698
    %v731 = vadd.f32 %v535, %v699
    %v732 = vadd.f32 %v536, %v700
    %v733 = vadd.f32 %v537, %v701
    %v734 = vadd.f32 %v538, %v702
    %v735 = vadd.f32 %v539, %v703
    %v736 = vadd.f32 %v540, %v704
    %v737 = vadd.f32 %v541, %v705
    %v738 = vadd.f32 %v542, %v706
    %v739 = vadd.f32 %v543, %v707
    %v740 = vadd.f32 %v544, %v708
    %v741 = vadd.f32 %v545, %v709
    %v742 = vadd.f32 %v546, %v710
    %v743 = vadd.f32 %v547, %v711
    %v744 = vadd.f32 %v548, %v712
    %v745 = vadd.f32 %v549, %v713
    %v746 = vadd.f32 %v550, %v714
    %v747 = vadd.f32 %v551, %v715
    %v748 = vadd.f32 %v552, %v716
    %v749 = vadd.f32 %v553, %v717
    %v750 = vadd.f32 %v554, %v718
    %v751 = vadd.f32 %v555, %v719
    %v752 = vadd.f32 %v556, %v720
    %v753 = vadd.f32 %v557, %v721
    %v754 = vadd.f32 %v558, %v722
    %v755 = vadd.f32 %v559, %v723
    %v756 = vadd.f32 %v560, %v724
    %757 = vset.pattern.permute.xlu0 2
    %758 = vperm.xlu0 %757, %v109
    %v759 = vpop.permute.xlu0 %758
    %761 = vset.pattern.permute.xlu0 2
    %762 = vperm.xlu0 %761, %v110
    %v763 = vpop.permute.xlu0 %762
    %765 = vset.pattern.permute.xlu0 2
    %766 = vperm.xlu0 %765, %v111
    %v767 = vpop.permute.xlu0 %766
    %769 = vset.pattern.permute.xlu0 2
    %770 = vperm.xlu0 %769, %v112
    %v771 = vpop.permute.xlu0 %770
    %773 = vset.pattern.permute.xlu0 2
    %774 = vperm.xlu0 %773, %v113
    %v775 = vpop.permute.xlu0 %774
    %777 = vset.pattern.permute.xlu0 2
    %778 = vperm.xlu0 %777, %v114
    %v779 = vpop.permute.xlu0 %778
    %781 = vset.pattern.permute.xlu0 2
    %782 = vperm.xlu0 %781, %v115
    %v783 = vpop.permute.xlu0 %782
    %785 = vset.pattern.permute.xlu0 2
    %786 = vperm.xlu0 %785, %v116
    %v787 = vpop.permute.xlu0 %786
    %789 = vset.pattern.permute.xlu0 2
    %790 = vperm.xlu0 %789, %v117
    %v791 = vpop.permute.xlu0 %790
    %793 = vset.pattern.permute.xlu0 2
    %794 = vperm.xlu0 %793, %v118
    %v795 = vpop.permute.xlu0 %794
    %797 = vset.pattern.permute.xlu0 2
    %798 = vperm.xlu0 %797, %v119
    %v799 = vpop.permute.xlu0 %798
    %801 = vset.pattern.permute.xlu0 2
    %802 = vperm.xlu0 %801, %v120
    %v803 = vpop.permute.xlu0 %802
    %805 = vset.pattern.permute.xlu0 2
    %806 = vperm.xlu0 %805, %v121
    %v807 = vpop.permute.xlu0 %806
    %809 = vset.pattern.permute.xlu0 2
    %810 = vperm.xlu0 %809, %v122
    %v811 = vpop.permute.xlu0 %810
    %813 = vset.pattern.permute.xlu0 2
    %814 = vperm.xlu0 %813, %v123
    %v815 = vpop.permute.xlu0 %814
    %817 = vset.pattern.permute.xlu0 2
    %818 = vperm.xlu0 %817, %v124
    %v819 = vpop.permute.xlu0 %818
    %821 = vset.pattern.permute.xlu0 2
    %822 = vperm.xlu0 %821, %v125
    %v823 = vpop.permute.xlu0 %822
    %825 = vset.pattern.permute.xlu0 2
    %826 = vperm.xlu0 %825, %v126
    %v827 = vpop.permute.xlu0 %826
    %829 = vset.pattern.permute.xlu0 2
    %830 = vperm.xlu0 %829, %v127
    %v831 = vpop.permute.xlu0 %830
    %833 = vset.pattern.permute.xlu0 2
    %834 = vperm.xlu0 %833, %v128
    %v835 = vpop.permute.xlu0 %834
    %837 = vset.pattern.permute.xlu0 2
    %838 = vperm.xlu0 %837, %v129
    %v839 = vpop.permute.xlu0 %838
    %841 = vset.pattern.permute.xlu0 2
    %842 = vperm.xlu0 %841, %v130
    %v843 = vpop.permute.xlu0 %842
    %845 = vset.pattern.permute.xlu0 2
    %846 = vperm.xlu0 %845, %v131
    %v847 = vpop.permute.xlu0 %846
    %849 = vset.pattern.permute.xlu0 2
    %850 = vperm.xlu0 %849, %v132
    %v851 = vpop.permute.xlu0 %850
    %853 = vset.pattern.permute.xlu0 2
    %854 = vperm.xlu0 %853, %v133
    %v855 = vpop.permute.xlu0 %854
    %857 = vset.pattern.permute.xlu0 2
    %858 = vperm.xlu0 %857, %v134
    %v859 = vpop.permute.xlu0 %858
    %861 = vset.pattern.permute.xlu0 2
    %862 = vperm.xlu0 %861, %v135
    %v863 = vpop.permute.xlu0 %862
    %865 = vset.pattern.permute.xlu0 2
    %866 = vperm.xlu0 %865, %v136
    %v867 = vpop.permute.xlu0 %866
    %869 = vset.pattern.permute.xlu0 2
    %870 = vperm.xlu0 %869, %v137
    %v871 = vpop.permute.xlu0 %870
    %873 = vset.pattern.permute.xlu0 2
    %874 = vperm.xlu0 %873, %v138
    %v875 = vpop.permute.xlu0 %874
    %877 = vset.pattern.permute.xlu0 2
    %878 = vperm.xlu0 %877, %v139
    %v879 = vpop.permute.xlu0 %878
    %881 = vset.pattern.permute.xlu0 2
    %882 = vperm.xlu0 %881, %v140
    %v883 = vpop.permute.xlu0 %882
    %v885 = vlaneseq
    %v886 = vshrl.u32 %v885, 7
    %v887 = vsub.s32 2, %v886
    %v888 = vrot.slane %v108, %v887
    %v889 = vmul.f32 %v759, %v888
    %v890 = vmul.f32 %v763, %v888
    %v891 = vmul.f32 %v767, %v888
    %v892 = vmul.f32 %v771, %v888
    %v893 = vmul.f32 %v775, %v888
    %v894 = vmul.f32 %v779, %v888
    %v895 = vmul.f32 %v783, %v888
    %v896 = vmul.f32 %v787, %v888
    %v897 = vmul.f32 %v791, %v888
    %v898 = vmul.f32 %v795, %v888
    %v899 = vmul.f32 %v799, %v888
    %v900 = vmul.f32 %v803, %v888
    %v901 = vmul.f32 %v807, %v888
    %v902 = vmul.f32 %v811, %v888
    %v903 = vmul.f32 %v815, %v888
    %v904 = vmul.f32 %v819, %v888
    %v905 = vmul.f32 %v823, %v888
    %v906 = vmul.f32 %v827, %v888
    %v907 = vmul.f32 %v831, %v888
    %v908 = vmul.f32 %v835, %v888
    %v909 = vmul.f32 %v839, %v888
    %v910 = vmul.f32 %v843, %v888
    %v911 = vmul.f32 %v847, %v888
    %v912 = vmul.f32 %v851, %v888
    %v913 = vmul.f32 %v855, %v888
    %v914 = vmul.f32 %v859, %v888
    %v915 = vmul.f32 %v863, %v888
    %v916 = vmul.f32 %v867, %v888
    %v917 = vmul.f32 %v871, %v888
    %v918 = vmul.f32 %v875, %v888
    %v919 = vmul.f32 %v879, %v888
    %v920 = vmul.f32 %v883, %v888
    %v921 = vadd.f32 %v725, %v889
    %v922 = vadd.f32 %v726, %v890
    %v923 = vadd.f32 %v727, %v891
    %v924 = vadd.f32 %v728, %v892
    %v925 = vadd.f32 %v729, %v893
    %v926 = vadd.f32 %v730, %v894
    %v927 = vadd.f32 %v731, %v895
    %v928 = vadd.f32 %v732, %v896
    %v929 = vadd.f32 %v733, %v897
    %v930 = vadd.f32 %v734, %v898
    %v931 = vadd.f32 %v735, %v899
    %v932 = vadd.f32 %v736, %v900
    %v933 = vadd.f32 %v737, %v901
    %v934 = vadd.f32 %v738, %v902
    %v935 = vadd.f32 %v739, %v903
    %v936 = vadd.f32 %v740, %v904
    %v937 = vadd.f32 %v741, %v905
    %v938 = vadd.f32 %v742, %v906
    %v939 = vadd.f32 %v743, %v907
    %v940 = vadd.f32 %v744, %v908
    %v941 = vadd.f32 %v745, %v909
    %v942 = vadd.f32 %v746, %v910
    %v943 = vadd.f32 %v747, %v911
    %v944 = vadd.f32 %v748, %v912
    %v945 = vadd.f32 %v749, %v913
    %v946 = vadd.f32 %v750, %v914
    %v947 = vadd.f32 %v751, %v915
    %v948 = vadd.f32 %v752, %v916
    %v949 = vadd.f32 %v753, %v917
    %v950 = vadd.f32 %v754, %v918
    %v951 = vadd.f32 %v755, %v919
    %v952 = vadd.f32 %v756, %v920
    %953 = vset.pattern.permute.xlu0 3
    %954 = vperm.xlu0 %953, %v109
    %v955 = vpop.permute.xlu0 %954
    %957 = vset.pattern.permute.xlu0 3
    %958 = vperm.xlu0 %957, %v110
    %v959 = vpop.permute.xlu0 %958
    %961 = vset.pattern.permute.xlu0 3
    %962 = vperm.xlu0 %961, %v111
    %v963 = vpop.permute.xlu0 %962
    %965 = vset.pattern.permute.xlu0 3
    %966 = vperm.xlu0 %965, %v112
    %v967 = vpop.permute.xlu0 %966
    %969 = vset.pattern.permute.xlu0 3
    %970 = vperm.xlu0 %969, %v113
    %v971 = vpop.permute.xlu0 %970
    %973 = vset.pattern.permute.xlu0 3
    %974 = vperm.xlu0 %973, %v114
    %v975 = vpop.permute.xlu0 %974
    %977 = vset.pattern.permute.xlu0 3
    %978 = vperm.xlu0 %977, %v115
    %v979 = vpop.permute.xlu0 %978
    %981 = vset.pattern.permute.xlu0 3
    %982 = vperm.xlu0 %981, %v116
    %v983 = vpop.permute.xlu0 %982
    %985 = vset.pattern.permute.xlu0 3
    %986 = vperm.xlu0 %985, %v117
    %v987 = vpop.permute.xlu0 %986
    %989 = vset.pattern.permute.xlu0 3
    %990 = vperm.xlu0 %989, %v118
    %v991 = vpop.permute.xlu0 %990
    %993 = vset.pattern.permute.xlu0 3
    %994 = vperm.xlu0 %993, %v119
    %v995 = vpop.permute.xlu0 %994
    %997 = vset.pattern.permute.xlu0 3
    %998 = vperm.xlu0 %997, %v120
    %v999 = vpop.permute.xlu0 %998
    %1001 = vset.pattern.permute.xlu0 3
    %1002 = vperm.xlu0 %1001, %v121
    %v1003 = vpop.permute.xlu0 %1002
    %1005 = vset.pattern.permute.xlu0 3
    %1006 = vperm.xlu0 %1005, %v122
    %v1007 = vpop.permute.xlu0 %1006
    %1009 = vset.pattern.permute.xlu0 3
    %1010 = vperm.xlu0 %1009, %v123
    %v1011 = vpop.permute.xlu0 %1010
    %1013 = vset.pattern.permute.xlu0 3
    %1014 = vperm.xlu0 %1013, %v124
    %v1015 = vpop.permute.xlu0 %1014
    %1017 = vset.pattern.permute.xlu0 3
    %1018 = vperm.xlu0 %1017, %v125
    %v1019 = vpop.permute.xlu0 %1018
    %1021 = vset.pattern.permute.xlu0 3
    %1022 = vperm.xlu0 %1021, %v126
    %v1023 = vpop.permute.xlu0 %1022
    %1025 = vset.pattern.permute.xlu0 3
    %1026 = vperm.xlu0 %1025, %v127
    %v1027 = vpop.permute.xlu0 %1026
    %1029 = vset.pattern.permute.xlu0 3
    %1030 = vperm.xlu0 %1029, %v128
    %v1031 = vpop.permute.xlu0 %1030
    %1033 = vset.pattern.permute.xlu0 3
    %1034 = vperm.xlu0 %1033, %v129
    %v1035 = vpop.permute.xlu0 %1034
    %1037 = vset.pattern.permute.xlu0 3
    %1038 = vperm.xlu0 %1037, %v130
    %v1039 = vpop.permute.xlu0 %1038
    %1041 = vset.pattern.permute.xlu0 3
    %1042 = vperm.xlu0 %1041, %v131
    %v1043 = vpop.permute.xlu0 %1042
    %1045 = vset.pattern.permute.xlu0 3
    %1046 = vperm.xlu0 %1045, %v132
    %v1047 = vpop.permute.xlu0 %1046
    %1049 = vset.pattern.permute.xlu0 3
    %1050 = vperm.xlu0 %1049, %v133
    %v1051 = vpop.permute.xlu0 %1050
    %1053 = vset.pattern.permute.xlu0 3
    %1054 = vperm.xlu0 %1053, %v134
    %v1055 = vpop.permute.xlu0 %1054
    %1057 = vset.pattern.permute.xlu0 3
    %1058 = vperm.xlu0 %1057, %v135
    %v1059 = vpop.permute.xlu0 %1058
    %1061 = vset.pattern.permute.xlu0 3
    %1062 = vperm.xlu0 %1061, %v136
    %v1063 = vpop.permute.xlu0 %1062
    %1065 = vset.pattern.permute.xlu0 3
    %1066 = vperm.xlu0 %1065, %v137
    %v1067 = vpop.permute.xlu0 %1066
    %1069 = vset.pattern.permute.xlu0 3
    %1070 = vperm.xlu0 %1069, %v138
    %v1071 = vpop.permute.xlu0 %1070
    %1073 = vset.pattern.permute.xlu0 3
    %1074 = vperm.xlu0 %1073, %v139
    %v1075 = vpop.permute.xlu0 %1074
    %1077 = vset.pattern.permute.xlu0 3
    %1078 = vperm.xlu0 %1077, %v140
    %v1079 = vpop.permute.xlu0 %1078
    %v1081 = vlaneseq
    %v1082 = vshrl.u32 %v1081, 7
    %v1083 = vsub.s32 3, %v1082
    %v1084 = vrot.slane %v108, %v1083
    %v1085 = vmul.f32 %v955, %v1084
    %v1086 = vmul.f32 %v959, %v1084
    %v1087 = vmul.f32 %v963, %v1084
    %v1088 = vmul.f32 %v967, %v1084
    %v1089 = vmul.f32 %v971, %v1084
    %v1090 = vmul.f32 %v975, %v1084
    %v1091 = vmul.f32 %v979, %v1084
    %v1092 = vmul.f32 %v983, %v1084
    %v1093 = vmul.f32 %v987, %v1084
    %v1094 = vmul.f32 %v991, %v1084
    %v1095 = vmul.f32 %v995, %v1084
    %v1096 = vmul.f32 %v999, %v1084
    %v1097 = vmul.f32 %v1003, %v1084
    %v1098 = vmul.f32 %v1007, %v1084
    %v1099 = vmul.f32 %v1011, %v1084
    %v1100 = vmul.f32 %v1015, %v1084
    %v1101 = vmul.f32 %v1019, %v1084
    %v1102 = vmul.f32 %v1023, %v1084
    %v1103 = vmul.f32 %v1027, %v1084
    %v1104 = vmul.f32 %v1031, %v1084
    %v1105 = vmul.f32 %v1035, %v1084
    %v1106 = vmul.f32 %v1039, %v1084
    %v1107 = vmul.f32 %v1043, %v1084
    %v1108 = vmul.f32 %v1047, %v1084
    %v1109 = vmul.f32 %v1051, %v1084
    %v1110 = vmul.f32 %v1055, %v1084
    %v1111 = vmul.f32 %v1059, %v1084
    %v1112 = vmul.f32 %v1063, %v1084
    %v1113 = vmul.f32 %v1067, %v1084
    %v1114 = vmul.f32 %v1071, %v1084
    %v1115 = vmul.f32 %v1075, %v1084
    %v1116 = vmul.f32 %v1079, %v1084
    %v1117 = vadd.f32 %v921, %v1085
    %v1118 = vadd.f32 %v922, %v1086
    %v1119 = vadd.f32 %v923, %v1087
    %v1120 = vadd.f32 %v924, %v1088
    %v1121 = vadd.f32 %v925, %v1089
    %v1122 = vadd.f32 %v926, %v1090
    %v1123 = vadd.f32 %v927, %v1091
    %v1124 = vadd.f32 %v928, %v1092
    %v1125 = vadd.f32 %v929, %v1093
    %v1126 = vadd.f32 %v930, %v1094
    %v1127 = vadd.f32 %v931, %v1095
    %v1128 = vadd.f32 %v932, %v1096
    %v1129 = vadd.f32 %v933, %v1097
    %v1130 = vadd.f32 %v934, %v1098
    %v1131 = vadd.f32 %v935, %v1099
    %v1132 = vadd.f32 %v936, %v1100
    %v1133 = vadd.f32 %v937, %v1101
    %v1134 = vadd.f32 %v938, %v1102
    %v1135 = vadd.f32 %v939, %v1103
    %v1136 = vadd.f32 %v940, %v1104
    %v1137 = vadd.f32 %v941, %v1105
    %v1138 = vadd.f32 %v942, %v1106
    %v1139 = vadd.f32 %v943, %v1107
    %v1140 = vadd.f32 %v944, %v1108
    %v1141 = vadd.f32 %v945, %v1109
    %v1142 = vadd.f32 %v946, %v1110
    %v1143 = vadd.f32 %v947, %v1111
    %v1144 = vadd.f32 %v948, %v1112
    %v1145 = vadd.f32 %v949, %v1113
    %v1146 = vadd.f32 %v950, %v1114
    %v1147 = vadd.f32 %v951, %v1115
    %v1148 = vadd.f32 %v952, %v1116
    %v1149 = vmax.f32 %v1117, 0.0
    %v1150 = vmax.f32 %v1118, 0.0
    %v1151 = vmax.f32 %v1119, 0.0
    %v1152 = vmax.f32 %v1120, 0.0
    %v1153 = vmax.f32 %v1121, 0.0
    %v1154 = vmax.f32 %v1122, 0.0
    %v1155 = vmax.f32 %v1123, 0.0
    %v1156 = vmax.f32 %v1124, 0.0
    %v1157 = vmax.f32 %v1125, 0.0
    %v1158 = vmax.f32 %v1126, 0.0
    %v1159 = vmax.f32 %v1127, 0.0
    %v1160 = vmax.f32 %v1128, 0.0
    %v1161 = vmax.f32 %v1129, 0.0
    %v1162 = vmax.f32 %v1130, 0.0
    %v1163 = vmax.f32 %v1131, 0.0
    %v1164 = vmax.f32 %v1132, 0.0
    %v1165 = vmax.f32 %v1133, 0.0
    %v1166 = vmax.f32 %v1134, 0.0
    %v1167 = vmax.f32 %v1135, 0.0
    %v1168 = vmax.f32 %v1136, 0.0
    %v1169 = vmax.f32 %v1137, 0.0
    %v1170 = vmax.f32 %v1138, 0.0
    %v1171 = vmax.f32 %v1139, 0.0
    %v1172 = vmax.f32 %v1140, 0.0
    %v1173 = vmax.f32 %v1141, 0.0
    %v1174 = vmax.f32 %v1142, 0.0
    %v1175 = vmax.f32 %v1143, 0.0
    %v1176 = vmax.f32 %v1144, 0.0
    %v1177 = vmax.f32 %v1145, 0.0
    %v1178 = vmax.f32 %v1146, 0.0
    %v1179 = vmax.f32 %v1147, 0.0
    %v1180 = vmax.f32 %v1148, 0.0
    %v1181 = vpack.c.bf16 %v1150, %v1149
    %v1182 = vpack.c.bf16 %v1152, %v1151
    %v1183 = vpack.c.bf16 %v1154, %v1153
    %v1184 = vpack.c.bf16 %v1156, %v1155
    %v1185 = vpack.c.bf16 %v1158, %v1157
    %v1186 = vpack.c.bf16 %v1160, %v1159
    %v1187 = vpack.c.bf16 %v1162, %v1161
    %v1188 = vpack.c.bf16 %v1164, %v1163
    %v1189 = vpack.c.bf16 %v1166, %v1165
    %v1190 = vpack.c.bf16 %v1168, %v1167
    %v1191 = vpack.c.bf16 %v1170, %v1169
    %v1192 = vpack.c.bf16 %v1172, %v1171
    %v1193 = vpack.c.bf16 %v1174, %v1173
    %v1194 = vpack.c.bf16 %v1176, %v1175
    %v1195 = vpack.c.bf16 %v1178, %v1177
    %v1196 = vpack.c.bf16 %v1180, %v1179
    %v1197 = vld [vmem:[#allocation9] sm:$0xff]
    %v1198 = vld [vmem:[#allocation9 + $0x8] sm:$0xff]
    %v1199 = vld [vmem:[#allocation9 + $0x10] sm:$0xff]
    %v1200 = vld [vmem:[#allocation9 + $0x18] sm:$0xff]
    %v1201 = vld [vmem:[#allocation9 + $0x20] sm:$0xff]
    %v1202 = vld [vmem:[#allocation9 + $0x28] sm:$0xff]
    %v1203 = vld [vmem:[#allocation9 + $0x30] sm:$0xff]
    %v1204 = vld [vmem:[#allocation9 + $0x38] sm:$0xff]
    %v1205 = vld [vmem:[#allocation9 + $0x40] sm:$0xff]
    %v1206 = vld [vmem:[#allocation9 + $0x48] sm:$0xff]
    %v1207 = vld [vmem:[#allocation9 + $0x50] sm:$0xff]
    %v1208 = vld [vmem:[#allocation9 + $0x58] sm:$0xff]
    %v1209 = vld [vmem:[#allocation9 + $0x60] sm:$0xff]
    %v1210 = vld [vmem:[#allocation9 + $0x68] sm:$0xff]
    %v1211 = vld [vmem:[#allocation9 + $0x70] sm:$0xff]
    %v1212 = vld [vmem:[#allocation9 + $0x78] sm:$0xff]
    %v1213 = vld [vmem:[#allocation9 + $0x80] sm:$0xff]
    %v1214 = vld [vmem:[#allocation9 + $0x88] sm:$0xff]
    %v1215 = vld [vmem:[#allocation9 + $0x90] sm:$0xff]
    %v1216 = vld [vmem:[#allocation9 + $0x98] sm:$0xff]
    %v1217 = vld [vmem:[#allocation9 + $0xa0] sm:$0xff]
    %v1218 = vld [vmem:[#allocation9 + $0xa8] sm:$0xff]
    %v1219 = vld [vmem:[#allocation9 + $0xb0] sm:$0xff]
    %v1220 = vld [vmem:[#allocation9 + $0xb8] sm:$0xff]
    %v1221 = vld [vmem:[#allocation9 + $0xc0] sm:$0xff]
    %v1222 = vld [vmem:[#allocation9 + $0xc8] sm:$0xff]
    %v1223 = vld [vmem:[#allocation9 + $0xd0] sm:$0xff]
    %v1224 = vld [vmem:[#allocation9 + $0xd8] sm:$0xff]
    %v1225 = vld [vmem:[#allocation9 + $0xe0] sm:$0xff]
    %v1226 = vld [vmem:[#allocation9 + $0xe8] sm:$0xff]
    %v1227 = vld [vmem:[#allocation9 + $0xf0] sm:$0xff]
    %v1228 = vld [vmem:[#allocation9 + $0xf8] sm:$0xff]
    %v1229 = vld [vmem:[#allocation11] sm:$0xff]
    %v1230 = vld [vmem:[#allocation11 + $0x8] sm:$0xff]
    %v1231 = vld [vmem:[#allocation11 + $0x10] sm:$0xff]
    %v1232 = vld [vmem:[#allocation11 + $0x18] sm:$0xff]
    %v1233 = vld [vmem:[#allocation11 + $0x20] sm:$0xff]
    %v1234 = vld [vmem:[#allocation11 + $0x28] sm:$0xff]
    %v1235 = vld [vmem:[#allocation11 + $0x30] sm:$0xff]
    %v1236 = vld [vmem:[#allocation11 + $0x38] sm:$0xff]
    %v1237 = vld [vmem:[#allocation11 + $0x40] sm:$0xff]
    %v1238 = vld [vmem:[#allocation11 + $0x48] sm:$0xff]
    %v1239 = vld [vmem:[#allocation11 + $0x50] sm:$0xff]
    %v1240 = vld [vmem:[#allocation11 + $0x58] sm:$0xff]
    %v1241 = vld [vmem:[#allocation11 + $0x60] sm:$0xff]
    %v1242 = vld [vmem:[#allocation11 + $0x68] sm:$0xff]
    %v1243 = vld [vmem:[#allocation11 + $0x70] sm:$0xff]
    %v1244 = vld [vmem:[#allocation11 + $0x78] sm:$0xff]
    %v1245 = vld [vmem:[#allocation11 + $0x80] sm:$0xff]
    %v1246 = vld [vmem:[#allocation11 + $0x88] sm:$0xff]
    %v1247 = vld [vmem:[#allocation11 + $0x90] sm:$0xff]
    %v1248 = vld [vmem:[#allocation11 + $0x98] sm:$0xff]
    %v1249 = vld [vmem:[#allocation11 + $0xa0] sm:$0xff]
    %v1250 = vld [vmem:[#allocation11 + $0xa8] sm:$0xff]
    %v1251 = vld [vmem:[#allocation11 + $0xb0] sm:$0xff]
    %v1252 = vld [vmem:[#allocation11 + $0xb8] sm:$0xff]
    %v1253 = vld [vmem:[#allocation11 + $0xc0] sm:$0xff]
    %v1254 = vld [vmem:[#allocation11 + $0xc8] sm:$0xff]
    %v1255 = vld [vmem:[#allocation11 + $0xd0] sm:$0xff]
    %v1256 = vld [vmem:[#allocation11 + $0xd8] sm:$0xff]
    %v1257 = vld [vmem:[#allocation11 + $0xe0] sm:$0xff]
    %v1258 = vld [vmem:[#allocation11 + $0xe8] sm:$0xff]
    %v1259 = vld [vmem:[#allocation11 + $0xf0] sm:$0xff]
    %v1260 = vld [vmem:[#allocation11 + $0xf8] sm:$0xff]
    %1262 = vset.pattern.permute.xlu0 0
    %1263 = vperm.xlu0 %1262, %v1229
    %v1264 = vpop.permute.xlu0 %1263
    %1267 = vset.pattern.permute.xlu0 0
    %1268 = vperm.xlu0 %1267, %v1230
    %v1269 = vpop.permute.xlu0 %1268
    %1272 = vset.pattern.permute.xlu0 0
    %1273 = vperm.xlu0 %1272, %v1231
    %v1274 = vpop.permute.xlu0 %1273
    %1277 = vset.pattern.permute.xlu0 0
    %1278 = vperm.xlu0 %1277, %v1232
    %v1279 = vpop.permute.xlu0 %1278
    %1282 = vset.pattern.permute.xlu0 0
    %1283 = vperm.xlu0 %1282, %v1233
    %v1284 = vpop.permute.xlu0 %1283
    %1287 = vset.pattern.permute.xlu0 0
    %1288 = vperm.xlu0 %1287, %v1234
    %v1289 = vpop.permute.xlu0 %1288
    %1292 = vset.pattern.permute.xlu0 0
    %1293 = vperm.xlu0 %1292, %v1235
    %v1294 = vpop.permute.xlu0 %1293
    %1297 = vset.pattern.permute.xlu0 0
    %1298 = vperm.xlu0 %1297, %v1236
    %v1299 = vpop.permute.xlu0 %1298
    %1302 = vset.pattern.permute.xlu0 0
    %1303 = vperm.xlu0 %1302, %v1237
    %v1304 = vpop.permute.xlu0 %1303
    %1307 = vset.pattern.permute.xlu0 0
    %1308 = vperm.xlu0 %1307, %v1238
    %v1309 = vpop.permute.xlu0 %1308
    %1312 = vset.pattern.permute.xlu0 0
    %1313 = vperm.xlu0 %1312, %v1239
    %v1314 = vpop.permute.xlu0 %1313
    %1317 = vset.pattern.permute.xlu0 0
    %1318 = vperm.xlu0 %1317, %v1240
    %v1319 = vpop.permute.xlu0 %1318
    %1322 = vset.pattern.permute.xlu0 0
    %1323 = vperm.xlu0 %1322, %v1241
    %v1324 = vpop.permute.xlu0 %1323
    %1327 = vset.pattern.permute.xlu0 0
    %1328 = vperm.xlu0 %1327, %v1242
    %v1329 = vpop.permute.xlu0 %1328
    %1332 = vset.pattern.permute.xlu0 0
    %1333 = vperm.xlu0 %1332, %v1243
    %v1334 = vpop.permute.xlu0 %1333
    %1337 = vset.pattern.permute.xlu0 0
    %1338 = vperm.xlu0 %1337, %v1244
    %v1339 = vpop.permute.xlu0 %1338
    %1342 = vset.pattern.permute.xlu0 0
    %1343 = vperm.xlu0 %1342, %v1245
    %v1344 = vpop.permute.xlu0 %1343
    %1347 = vset.pattern.permute.xlu0 0
    %1348 = vperm.xlu0 %1347, %v1246
    %v1349 = vpop.permute.xlu0 %1348
    %1352 = vset.pattern.permute.xlu0 0
    %1353 = vperm.xlu0 %1352, %v1247
    %v1354 = vpop.permute.xlu0 %1353
    %1357 = vset.pattern.permute.xlu0 0
    %1358 = vperm.xlu0 %1357, %v1248
    %v1359 = vpop.permute.xlu0 %1358
    %1362 = vset.pattern.permute.xlu0 0
    %1363 = vperm.xlu0 %1362, %v1249
    %v1364 = vpop.permute.xlu0 %1363
    %1367 = vset.pattern.permute.xlu0 0
    %1368 = vperm.xlu0 %1367, %v1250
    %v1369 = vpop.permute.xlu0 %1368
    %1372 = vset.pattern.permute.xlu0 0
    %1373 = vperm.xlu0 %1372, %v1251
    %v1374 = vpop.permute.xlu0 %1373
    %1377 = vset.pattern.permute.xlu0 0
    %1378 = vperm.xlu0 %1377, %v1252
    %v1379 = vpop.permute.xlu0 %1378
    %1382 = vset.pattern.permute.xlu0 0
    %1383 = vperm.xlu0 %1382, %v1253
    %v1384 = vpop.permute.xlu0 %1383
    %1387 = vset.pattern.permute.xlu0 0
    %1388 = vperm.xlu0 %1387, %v1254
    %v1389 = vpop.permute.xlu0 %1388
    %1392 = vset.pattern.permute.xlu0 0
    %1393 = vperm.xlu0 %1392, %v1255
    %v1394 = vpop.permute.xlu0 %1393
    %1397 = vset.pattern.permute.xlu0 0
    %1398 = vperm.xlu0 %1397, %v1256
    %v1399 = vpop.permute.xlu0 %1398
    %1402 = vset.pattern.permute.xlu0 0
    %1403 = vperm.xlu0 %1402, %v1257
    %v1404 = vpop.permute.xlu0 %1403
    %1407 = vset.pattern.permute.xlu0 0
    %1408 = vperm.xlu0 %1407, %v1258
    %v1409 = vpop.permute.xlu0 %1408
    %1412 = vset.pattern.permute.xlu0 0
    %1413 = vperm.xlu0 %1412, %v1259
    %v1414 = vpop.permute.xlu0 %1413
    %1417 = vset.pattern.permute.xlu0 0
    %1418 = vperm.xlu0 %1417, %v1260
    %v1419 = vpop.permute.xlu0 %1418
    %v1453 = vunpack.c.l.b16 %v1197
    %v1454 = vunpack.c.h.b16 %v1197
    %v1455 = vunpack.c.l.b16 %v1198
    %v1456 = vunpack.c.h.b16 %v1198
    %v1457 = vunpack.c.l.b16 %v1199
    %v1458 = vunpack.c.h.b16 %v1199
    %v1459 = vunpack.c.l.b16 %v1200
    %v1460 = vunpack.c.h.b16 %v1200
    %v1461 = vunpack.c.l.b16 %v1201
    %v1462 = vunpack.c.h.b16 %v1201
    %v1463 = vunpack.c.l.b16 %v1202
    %v1464 = vunpack.c.h.b16 %v1202
    %v1465 = vunpack.c.l.b16 %v1203
    %v1466 = vunpack.c.h.b16 %v1203
    %v1467 = vunpack.c.l.b16 %v1204
    %v1468 = vunpack.c.h.b16 %v1204
    %v1469 = vunpack.c.l.b16 %v1205
    %v1470 = vunpack.c.h.b16 %v1205
    %v1471 = vunpack.c.l.b16 %v1206
    %v1472 = vunpack.c.h.b16 %v1206
    %v1473 = vunpack.c.l.b16 %v1207
    %v1474 = vunpack.c.h.b16 %v1207
    %v1475 = vunpack.c.l.b16 %v1208
    %v1476 = vunpack.c.h.b16 %v1208
    %v1477 = vunpack.c.l.b16 %v1209
    %v1478 = vunpack.c.h.b16 %v1209
    %v1479 = vunpack.c.l.b16 %v1210
    %v1480 = vunpack.c.h.b16 %v1210
    %v1481 = vunpack.c.l.b16 %v1211
    %v1482 = vunpack.c.h.b16 %v1211
    %v1483 = vunpack.c.l.b16 %v1212
    %v1484 = vunpack.c.h.b16 %v1212
    %v1485 = vunpack.c.l.b16 %v1213
    %v1486 = vunpack.c.h.b16 %v1213
    %v1487 = vunpack.c.l.b16 %v1214
    %v1488 = vunpack.c.h.b16 %v1214
    %v1489 = vunpack.c.l.b16 %v1215
    %v1490 = vunpack.c.h.b16 %v1215
    %v1491 = vunpack.c.l.b16 %v1216
    %v1492 = vunpack.c.h.b16 %v1216
    %v1493 = vunpack.c.l.b16 %v1217
    %v1494 = vunpack.c.h.b16 %v1217
    %v1495 = vunpack.c.l.b16 %v1218
    %v1496 = vunpack.c.h.b16 %v1218
    %v1497 = vunpack.c.l.b16 %v1219
    %v1498 = vunpack.c.h.b16 %v1219
    %v1499 = vunpack.c.l.b16 %v1220
    %v1500 = vunpack.c.h.b16 %v1220
    %v1501 = vunpack.c.l.b16 %v1221
    %v1502 = vunpack.c.h.b16 %v1221
    %v1503 = vunpack.c.l.b16 %v1222
    %v1504 = vunpack.c.h.b16 %v1222
    %v1505 = vunpack.c.l.b16 %v1223
    %v1506 = vunpack.c.h.b16 %v1223
    %v1507 = vunpack.c.l.b16 %v1224
    %v1508 = vunpack.c.h.b16 %v1224
    %v1509 = vunpack.c.l.b16 %v1225
    %v1510 = vunpack.c.h.b16 %v1225
    %v1511 = vunpack.c.l.b16 %v1226
    %v1512 = vunpack.c.h.b16 %v1226
    %v1513 = vunpack.c.l.b16 %v1227
    %v1514 = vunpack.c.h.b16 %v1227
    %v1515 = vunpack.c.l.b16 %v1228
    %v1516 = vunpack.c.h.b16 %v1228
    %v1517 = vpack.c.b16 %v1455, %v1453
    %v1518 = vpack.c.b16 %v1456, %v1454
    %v1519 = vpack.c.b16 %v1459, %v1457
    %v1520 = vpack.c.b16 %v1460, %v1458
    %v1521 = vpack.c.b16 %v1463, %v1461
    %v1522 = vpack.c.b16 %v1464, %v1462
    %v1523 = vpack.c.b16 %v1467, %v1465
    %v1524 = vpack.c.b16 %v1468, %v1466
    %v1525 = vpack.c.b16 %v1471, %v1469
    %v1526 = vpack.c.b16 %v1472, %v1470
    %v1527 = vpack.c.b16 %v1475, %v1473
    %v1528 = vpack.c.b16 %v1476, %v1474
    %v1529 = vpack.c.b16 %v1479, %v1477
    %v1530 = vpack.c.b16 %v1480, %v1478
    %v1531 = vpack.c.b16 %v1483, %v1481
    %v1532 = vpack.c.b16 %v1484, %v1482
    %v1533 = vpack.c.b16 %v1487, %v1485
    %v1534 = vpack.c.b16 %v1488, %v1486
    %v1535 = vpack.c.b16 %v1491, %v1489
    %v1536 = vpack.c.b16 %v1492, %v1490
    %v1537 = vpack.c.b16 %v1495, %v1493
    %v1538 = vpack.c.b16 %v1496, %v1494
    %v1539 = vpack.c.b16 %v1499, %v1497
    %v1540 = vpack.c.b16 %v1500, %v1498
    %v1541 = vpack.c.b16 %v1503, %v1501
    %v1542 = vpack.c.b16 %v1504, %v1502
    %v1543 = vpack.c.b16 %v1507, %v1505
    %v1544 = vpack.c.b16 %v1508, %v1506
    %v1545 = vpack.c.b16 %v1511, %v1509
    %v1546 = vpack.c.b16 %v1512, %v1510
    %v1547 = vpack.c.b16 %v1515, %v1513
    %v1548 = vpack.c.b16 %v1516, %v1514
    %1581 = vmatprep.subr.bf16.mxu0 0
    %1582 = vmatpush1.bf16.msra.mxu0 %v1181
    %1583 = vmatprep.subr.bf16.mxu0 0
    %1584 = vmatpush1.bf16.msra.mxu0 %v1182
    %1585 = vmatprep.subr.bf16.mxu0 0
    %1586 = vmatpush1.bf16.msra.mxu0 %v1183
    %1587 = vmatprep.subr.bf16.mxu0 0
    %1588 = vmatpush1.bf16.msra.mxu0 %v1184
    %1589 = vmatprep.subr.bf16.mxu0 0
    %1590 = vmatpush1.bf16.msra.mxu0 %v1185
    %1591 = vmatprep.subr.bf16.mxu0 0
    %1592 = vmatpush1.bf16.msra.mxu0 %v1186
    %1593 = vmatprep.subr.bf16.mxu0 0
    %1594 = vmatpush1.bf16.msra.mxu0 %v1187
    %1595 = vmatprep.subr.bf16.mxu0 0
    %1596 = vmatpush1.bf16.msra.mxu0 %v1188
    %1597 = vmatprep.subr.bf16.mxu0 0
    %1598 = vmatpush1.bf16.msra.mxu0 %v1189
    %1599 = vmatprep.subr.bf16.mxu0 0
    %1600 = vmatpush1.bf16.msra.mxu0 %v1190
    %1601 = vmatprep.subr.bf16.mxu0 0
    %1602 = vmatpush1.bf16.msra.mxu0 %v1191
    %1603 = vmatprep.subr.bf16.mxu0 0
    %1604 = vmatpush1.bf16.msra.mxu0 %v1192
    %1605 = vmatprep.subr.bf16.mxu0 0
    %1606 = vmatpush1.bf16.msra.mxu0 %v1193
    %1607 = vmatprep.subr.bf16.mxu0 0
    %1608 = vmatpush1.bf16.msra.mxu0 %v1194
    %1609 = vmatprep.subr.bf16.mxu0 0
    %1610 = vmatpush1.bf16.msra.mxu0 %v1195
    %1611 = vmatprep.subr.bf16.mxu0 0
    %1612 = vmatpush1.bf16.msra.mxu0 %v1196
    %1613 = vmatprep.mubr.bf16.mxu0 %v1518
    %1614 = vmatmul.mubr.bf16.gmra.mrb[0].mxu0 %v1517
    %v1615 = vpop.f32.mrb[0].mxu0
    %v1616 = vadd.f32 %v1264, %v1615
    %v1617 = vpop.f32.mrb[0].mxu0
    %v1618 = vpop.f32.mrb[0].mxu0
    %v1619 = vadd.f32 %v1269, %v1618
    %v1620 = vpop.f32.mrb[0].mxu0
    %1621 = vmatprep.mubr.bf16.mxu0 %v1520
    %1622 = vmatmul.mubr.bf16.gmra.mrb[0].mxu0 %v1519
    %v1623 = vpop.f32.mrb[0].mxu0
    %v1624 = vadd.f32 %v1274, %v1623
    %v1625 = vpop.f32.mrb[0].mxu0
    %v1626 = vpop.f32.mrb[0].mxu0
    %v1627 = vadd.f32 %v1279, %v1626
    %v1628 = vpop.f32.mrb[0].mxu0
    %1629 = vmatprep.mubr.bf16.mxu0 %v1522
    %1630 = vmatmul.mubr.bf16.gmra.mrb[0].mxu0 %v1521
    %v1631 = vpop.f32.mrb[0].mxu0
    %v1632 = vadd.f32 %v1284, %v1631
    %v1633 = vpop.f32.mrb[0].mxu0
    %v1634 = vpop.f32.mrb[0].mxu0
    %v1635 = vadd.f32 %v1289, %v1634
    %v1636 = vpop.f32.mrb[0].mxu0
    %1637 = vmatprep.mubr.bf16.mxu0 %v1524
    %1638 = vmatmul.mubr.bf16.gmra.mrb[0].mxu0 %v1523
    %v1639 = vpop.f32.mrb[0].mxu0
    %v1640 = vadd.f32 %v1294, %v1639
    %v1641 = vpop.f32.mrb[0].mxu0
    %v1642 = vpop.f32.mrb[0].mxu0
    %v1643 = vadd.f32 %v1299, %v1642
    %v1644 = vpop.f32.mrb[0].mxu0
    %1645 = vmatprep.mubr.bf16.mxu0 %v1526
    %1646 = vmatmul.mubr.bf16.gmra.mrb[0].mxu0 %v1525
    %v1647 = vpop.f32.mrb[0].mxu0
    %v1648 = vadd.f32 %v1304, %v1647
    %v1649 = vpop.f32.mrb[0].mxu0
    %v1650 = vpop.f32.mrb[0].mxu0
    %v1651 = vadd.f32 %v1309, %v1650
    %v1652 = vpop.f32.mrb[0].mxu0
    %1653 = vmatprep.mubr.bf16.mxu0 %v1528
    %1654 = vmatmul.mubr.bf16.gmra.mrb[0].mxu0 %v1527
    %v1655 = vpop.f32.mrb[0].mxu0
    %v1656 = vadd.f32 %v1314, %v1655
    %v1657 = vpop.f32.mrb[0].mxu0
    %v1658 = vpop.f32.mrb[0].mxu0
    %v1659 = vadd.f32 %v1319, %v1658
    %v1660 = vpop.f32.mrb[0].mxu0
    %1661 = vmatprep.mubr.bf16.mxu0 %v1530
    %1662 = vmatmul.mubr.bf16.gmra.mrb[0].mxu0 %v1529
    %v1663 = vpop.f32.mrb[0].mxu0
    %v1664 = vadd.f32 %v1324, %v1663
    %v1665 = vpop.f32.mrb[0].mxu0
    %v1666 = vpop.f32.mrb[0].mxu0
    %v1667 = vadd.f32 %v1329, %v1666
    %v1668 = vpop.f32.mrb[0].mxu0
    %1669 = vmatprep.mubr.bf16.mxu0 %v1532
    %1670 = vmatmul.mubr.bf16.gmra.mrb[0].mxu0 %v1531
    %v1671 = vpop.f32.mrb[0].mxu0
    %v1672 = vadd.f32 %v1334, %v1671
    %v1673 = vpop.f32.mrb[0].mxu0
    %v1674 = vpop.f32.mrb[0].mxu0
    %v1675 = vadd.f32 %v1339, %v1674
    %v1676 = vpop.f32.mrb[0].mxu0
    %1677 = vmatprep.mubr.bf16.mxu0 %v1534
    %1678 = vmatmul.mubr.bf16.gmra.mrb[0].mxu0 %v1533
    %v1679 = vpop.f32.mrb[0].mxu0
    %v1680 = vadd.f32 %v1344, %v1679
    %v1681 = vpop.f32.mrb[0].mxu0
    %v1682 = vpop.f32.mrb[0].mxu0
    %v1683 = vadd.f32 %v1349, %v1682
    %v1684 = vpop.f32.mrb[0].mxu0
    %1685 = vmatprep.mubr.bf16.mxu0 %v1536
    %1686 = vmatmul.mubr.bf16.gmra.mrb[0].mxu0 %v1535
    %v1687 = vpop.f32.mrb[0].mxu0
    %v1688 = vadd.f32 %v1354, %v1687
    %v1689 = vpop.f32.mrb[0].mxu0
    %v1690 = vpop.f32.mrb[0].mxu0
    %v1691 = vadd.f32 %v1359, %v1690
    %v1692 = vpop.f32.mrb[0].mxu0
    %1693 = vmatprep.mubr.bf16.mxu0 %v1538
    %1694 = vmatmul.mubr.bf16.gmra.mrb[0].mxu0 %v1537
    %v1695 = vpop.f32.mrb[0].mxu0
    %v1696 = vadd.f32 %v1364, %v1695
    %v1697 = vpop.f32.mrb[0].mxu0
    %v1698 = vpop.f32.mrb[0].mxu0
    %v1699 = vadd.f32 %v1369, %v1698
    %v1700 = vpop.f32.mrb[0].mxu0
    %1701 = vmatprep.mubr.bf16.mxu0 %v1540
    %1702 = vmatmul.mubr.bf16.gmra.mrb[0].mxu0 %v1539
    %v1703 = vpop.f32.mrb[0].mxu0
    %v1704 = vadd.f32 %v1374, %v1703
    %v1705 = vpop.f32.mrb[0].mxu0
    %v1706 = vpop.f32.mrb[0].mxu0
    %v1707 = vadd.f32 %v1379, %v1706
    %v1708 = vpop.f32.mrb[0].mxu0
    %1709 = vmatprep.mubr.bf16.mxu0 %v1542
    %1710 = vmatmul.mubr.bf16.gmra.mrb[0].mxu0 %v1541
    %v1711 = vpop.f32.mrb[0].mxu0
    %v1712 = vadd.f32 %v1384, %v1711
    %v1713 = vpop.f32.mrb[0].mxu0
    %v1714 = vpop.f32.mrb[0].mxu0
    %v1715 = vadd.f32 %v1389, %v1714
    %v1716 = vpop.f32.mrb[0].mxu0
    %1717 = vmatprep.mubr.bf16.mxu0 %v1544
    %1718 = vmatmul.mubr.bf16.gmra.mrb[0].mxu0 %v1543
    %v1719 = vpop.f32.mrb[0].mxu0
    %v1720 = vadd.f32 %v1394, %v1719
    %v1721 = vpop.f32.mrb[0].mxu0
    %v1722 = vpop.f32.mrb[0].mxu0
    %v1723 = vadd.f32 %v1399, %v1722
    %v1724 = vpop.f32.mrb[0].mxu0
    %1725 = vmatprep.mubr.bf16.mxu0 %v1546
    %1726 = vmatmul.mubr.bf16.gmra.mrb[0].mxu0 %v1545
    %v1727 = vpop.f32.mrb[0].mxu0
    %v1728 = vadd.f32 %v1404, %v1727
    %v1729 = vpop.f32.mrb[0].mxu0
    %v1730 = vpop.f32.mrb[0].mxu0
    %v1731 = vadd.f32 %v1409, %v1730
    %v1732 = vpop.f32.mrb[0].mxu0
    %1733 = vmatprep.mubr.bf16.mxu0 %v1548
    %1734 = vmatmul.mubr.bf16.gmra.mrb[0].mxu0 %v1547
    %v1735 = vpop.f32.mrb[0].mxu0
    %v1736 = vadd.f32 %v1414, %v1735
    %v1737 = vpop.f32.mrb[0].mxu0
    %v1738 = vpop.f32.mrb[0].mxu0
    %v1739 = vadd.f32 %v1419, %v1738
    %v1740 = vpop.f32.mrb[0].mxu0
    %1741 = vdwg.mxu0
    %v1742 = vmax.f32 %v1616, 0.0
    %v1743 = vmax.f32 %v1619, 0.0
    %v1744 = vmax.f32 %v1624, 0.0
    %v1745 = vmax.f32 %v1627, 0.0
    %v1746 = vmax.f32 %v1632, 0.0
    %v1747 = vmax.f32 %v1635, 0.0
    %v1748 = vmax.f32 %v1640, 0.0
    %v1749 = vmax.f32 %v1643, 0.0
    %v1750 = vmax.f32 %v1648, 0.0
    %v1751 = vmax.f32 %v1651, 0.0
    %v1752 = vmax.f32 %v1656, 0.0
    %v1753 = vmax.f32 %v1659, 0.0
    %v1754 = vmax.f32 %v1664, 0.0
    %v1755 = vmax.f32 %v1667, 0.0
    %v1756 = vmax.f32 %v1672, 0.0
    %v1757 = vmax.f32 %v1675, 0.0
    %v1758 = vmax.f32 %v1680, 0.0
    %v1759 = vmax.f32 %v1683, 0.0
    %v1760 = vmax.f32 %v1688, 0.0
    %v1761 = vmax.f32 %v1691, 0.0
    %v1762 = vmax.f32 %v1696, 0.0
    %v1763 = vmax.f32 %v1699, 0.0
    %v1764 = vmax.f32 %v1704, 0.0
    %v1765 = vmax.f32 %v1707, 0.0
    %v1766 = vmax.f32 %v1712, 0.0
    %v1767 = vmax.f32 %v1715, 0.0
    %v1768 = vmax.f32 %v1720, 0.0
    %v1769 = vmax.f32 %v1723, 0.0
    %v1770 = vmax.f32 %v1728, 0.0
    %v1771 = vmax.f32 %v1731, 0.0
    %v1772 = vmax.f32 %v1736, 0.0
    %v1773 = vmax.f32 %v1739, 0.0
    %v1774 = vld [vmem:[#allocation12] sm:$0xff]
    %v1775 = vpack.c.bf16 %v1743, %v1742
    %v1776 = vpack.c.bf16 %v1745, %v1744
    %v1777 = vpack.c.bf16 %v1747, %v1746
    %v1778 = vpack.c.bf16 %v1749, %v1748
    %v1779 = vpack.c.bf16 %v1751, %v1750
    %v1780 = vpack.c.bf16 %v1753, %v1752
    %v1781 = vpack.c.bf16 %v1755, %v1754
    %v1782 = vpack.c.bf16 %v1757, %v1756
    %v1783 = vpack.c.bf16 %v1759, %v1758
    %v1784 = vpack.c.bf16 %v1761, %v1760
    %v1785 = vpack.c.bf16 %v1763, %v1762
    %v1786 = vpack.c.bf16 %v1765, %v1764
    %v1787 = vpack.c.bf16 %v1767, %v1766
    %v1788 = vpack.c.bf16 %v1769, %v1768
    %v1789 = vpack.c.bf16 %v1771, %v1770
    %v1790 = vpack.c.bf16 %v1773, %v1772
    %v1792 = vunpack.c.l.b16 %v1774
    %v1793 = vunpack.c.h.b16 %v1774
    %v1794 = vpack.c.b16 %v1792, %v1792
    %v1795 = vpack.c.b16 %v1793, %v1793
    %1798 = vmatprep.subr.bf16.mxu0 0
    %1799 = vmatpush1.bf16.msra.mxu0 %v1775
    %1800 = vmatprep.subr.bf16.mxu0 0
    %1801 = vmatpush1.bf16.msra.mxu0 %v1776
    %1802 = vmatprep.subr.bf16.mxu0 0
    %1803 = vmatpush1.bf16.msra.mxu0 %v1777
    %1804 = vmatprep.subr.bf16.mxu0 0
    %1805 = vmatpush1.bf16.msra.mxu0 %v1778
    %1806 = vmatprep.subr.bf16.mxu0 0
    %1807 = vmatpush1.bf16.msra.mxu0 %v1779
    %1808 = vmatprep.subr.bf16.mxu0 0
    %1809 = vmatpush1.bf16.msra.mxu0 %v1780
    %1810 = vmatprep.subr.bf16.mxu0 0
    %1811 = vmatpush1.bf16.msra.mxu0 %v1781
    %1812 = vmatprep.subr.bf16.mxu0 0
    %1813 = vmatpush1.bf16.msra.mxu0 %v1782
    %1814 = vmatprep.subr.bf16.mxu0 0
    %1815 = vmatpush1.bf16.msra.mxu0 %v1783
    %1816 = vmatprep.subr.bf16.mxu0 0
    %1817 = vmatpush1.bf16.msra.mxu0 %v1784
    %1818 = vmatprep.subr.bf16.mxu0 0
    %1819 = vmatpush1.bf16.msra.mxu0 %v1785
    %1820 = vmatprep.subr.bf16.mxu0 0
    %1821 = vmatpush1.bf16.msra.mxu0 %v1786
    %1822 = vmatprep.subr.bf16.mxu0 0
    %1823 = vmatpush1.bf16.msra.mxu0 %v1787
    %1824 = vmatprep.subr.bf16.mxu0 0
    %1825 = vmatpush1.bf16.msra.mxu0 %v1788
    %1826 = vmatprep.subr.bf16.mxu0 0
    %1827 = vmatpush1.bf16.msra.mxu0 %v1789
    %1828 = vmatprep.subr.bf16.mxu0 0
    %1829 = vmatpush1.bf16.msra.mxu0 %v1790
    %1830 = vmatprep.mubr.bf16.mxu0 %v1795
    %1831 = vmatmul.mubr.bf16.gmra.mrb[0].mxu0 %v1794
    %v1832 = vpop.f32.mrb[0].mxu0
    %v1833 = vadd.f32 0.0, %v1832
    %v1834 = vpop.f32.mrb[0].mxu0
    %v1835 = vpop.f32.mrb[0].mxu0
    %v1836 = vpop.f32.mrb[0].mxu0
    %1837 = vdwg.mxu0
    %v1838 = vld [vmem:[#allocation2] sm:$0x1]
    %1840 = vset.pattern.permute.xlu0 0
    %1841 = vperm.xlu0 %1840, %v1838
    %v1842 = vpop.permute.xlu0 %1841
    %v1844 = vlaneseq
    %v1845 = vshrl.u32 %v1844, 7
    %v1846 = vsub.s32 0, %v1845
    %v1847 = vrot.slane %v1842, %v1846
    %v1848 = vadd.f32 %v1833, %v1847
    %1849 = vst [vmem:[#allocation14] sm:$0x1] %v1848
    // Predicated region
    $region54: #{tpu_custom_call.1} parent=1 // pred_check
      _
    $region55: #{tpu_custom_call.1} parent=1 // pred_check_branch
      %1851 = sbr.rel (0) target = $region57
    $region56: #{tpu_custom_call.1} parent=1 // pred_region
      %s1853 = ssub.s32 16, 16
      %1854 = vsyncadd [#allocation5], %s1853
      %s1856 = sshll.u32 [#allocation14], 4
      %s1857 = int_to_ptr.vmem [resolvable:$true] %s1856
      %1859 = dma.vmem_to_hbm [thread:$0]  %s1857, 16, %s7, [#allocation5]
    $region57: #{tpu_custom_call.1} parent=1 // pred_fallthru
      _
    // Predicated region
    $region58: #{tpu_custom_call.1} parent=1 // pred_check
      _
    $region59: #{tpu_custom_call.1} parent=1 // pred_check_branch
      %1861 = sbr.rel (0) target = $region61
    $region60: #{tpu_custom_call.1} parent=1 // pred_region
      %1862 = dma.done [#allocation5], 16
    $region61: #{tpu_custom_call.1} parent=1 // pred_fallthru
      _
    %1863 = vsyncpa [#allocation4], 1
    %1864 = vsyncpa [#allocation7], 1
    %1865 = vsyncpa [#allocation10], 1
    %1866 = vsyncpa [#allocation13], 1
    %1867 = vsyncpa [#allocation5], 1

</llo_original>
